<compile_context>
chip_gen: v7x
topology: tpu7x:2x2x1
jax: 0.10.0
libtpu: 0.0.40
codegen_flags: <defaults>
</compile_context>

<pallas_src>
import functools

import numpy as np

import jax
import jax.numpy as jnp
from jax.experimental import pallas as pl
from jax.experimental.pallas import tpu as pltpu


# -----------------------------------------------------------------------------
# Fused kernel
# -----------------------------------------------------------------------------
def _tiny_deco_kernel(patches_ref, xin_ref, slab_ref, y_ref, *,
                      n_convs, C, M, K1, out_c, n_pad, lay, tap_shifts):
    C9 = 9 * C

    # ---- static views of the single packed operand slab ----------------------
    masks = slab_ref[pl.ds(lay["mask"], M), pl.ds(0, C9)]      # (M, 9*C)
    w1 = slab_ref[pl.ds(lay["w1"], K1), pl.ds(0, C)]           # (K1, C)
    wo = slab_ref[pl.ds(lay["wo"], C), :]                      # (C, n_pad)
    bo = slab_ref[pl.ds(lay["bo"], 1), :]                      # (1, n_pad)

    # ---- conv1 (5x5, s=4, BN1 folded into the weight) + ReLU -----------------
    h = jnp.maximum(
        jnp.dot(patches_ref[...], w1, preferred_element_type=jnp.float32),
        0.0)

    def conv3x3(inp, conv_idx):
        """3x3 / stride 1 / pad 1 conv (BN folded) as ONE (M,9C)x(9C,C) matmul.

        The 9 shifted views are XLU rolls of the live activation; the masks
        zero every row whose tap falls outside the image (this also covers all
        cyclic wraps and cross-image bleed)."""
        tiles = []
        for t in range(9):
            s = tap_shifts[t]
            tiles.append(inp if s == 0 else pltpu.roll(inp, s, 0))
        packed = jnp.concatenate(tiles, axis=1) * masks        # (M, 9*C)
        w = slab_ref[pl.ds(lay["wb"] + conv_idx * C9, C9), pl.ds(0, C)]
        return jnp.dot(packed, w, preferred_element_type=jnp.float32)

    # ---- BasicBlocks (two 3x3 convs + residual each) -------------------------
    conv_idx = 0
    for _ in range(n_convs // 2):
        identity = h
        h = jnp.maximum(conv3x3(h, conv_idx), 0.0)
        conv_idx += 1
        h = jnp.maximum(conv3x3(h, conv_idx) + identity, 0.0)
        conv_idx += 1

    # ---- conv_out (1x1 + bias), zero-padded to n_pad output lanes ------------
    acc = jnp.dot(h, wo, preferred_element_type=jnp.float32) + bo

    # ---- DECO ratio on the pre-tanh output (padded lanes are exactly zero) ---
    ss_out = jnp.sum(acc * acc, keepdims=True)                 # (1,1) ||x||^2
    xin = xin_ref[...]
    ss_in = jnp.sum(xin * xin, keepdims=True)                  # (1,1) ||in||^2
    ratio = jnp.sqrt(ss_in / ss_out)

    # Pack the ratio into an unused lane (row 0, lane out_c) of the output slab
    # so there is only one (lane-dense, unmasked) output store.
    rows = jax.lax.broadcasted_iota(jnp.int32, (M, n_pad), 0)
    cols = jax.lax.broadcasted_iota(jnp.int32, (M, n_pad), 1)
    slot = (rows == 0) & (cols == out_c)
    y_ref[...] = jnp.where(slot, ratio, jnp.tanh(acc))


# -----------------------------------------------------------------------------
# Host-side glue
# -----------------------------------------------------------------------------
def _round8(n):
    return ((n + 7) // 8) * 8


def _slab_layout(M, K1, C, n_convs, n_pad):
    """Row layout of the single packed static-operand slab (all 8-aligned)."""
    mask_off = 0
    w1_off = mask_off + _round8(M)
    wb_off = w1_off + _round8(K1)
    wo_off = wb_off + _round8(n_convs * 9 * C)
    bo_off = wo_off + _round8(C)
    rows = bo_off + 8
    return {"mask": mask_off, "w1": w1_off, "wb": wb_off,
            "wo": wo_off, "bo": bo_off, "rows": rows, "n_pad": n_pad}


def _im2col(x_nhwc, ksize, stride, pad):
    """im2col for conv1 only (tiny, built once from the input).
    # TODO(synk): could be pulled in-kernel with the same roll/mask trick to
    #             drop this XLA slice/concat and the separate x_flat DMA."""
    B, H, W, C = x_nhwc.shape
    xp = jnp.pad(x_nhwc, ((0, 0), (pad, pad), (pad, pad), (0, 0)))
    OH = (H + 2 * pad - ksize) // stride + 1
    OW = (W + 2 * pad - ksize) // stride + 1
    cols = []
    for kh in range(ksize):
        for kw in range(ksize):
            cols.append(xp[:, kh:kh + stride * OH:stride,
                           kw:kw + stride * OW:stride, :])
    patches = jnp.concatenate(cols, axis=-1)          # (B, OH, OW, k*k*C)
    return patches.reshape(B * OH * OW, ksize * ksize * C), OH, OW


def bn_fold(c, eps=1e-5):
    # init_weights(): gamma=1, beta=0; default running stats mean=0, var=1.
    gamma = np.ones((c,), np.float32)
    beta = np.zeros((c,), np.float32)
    mean = np.zeros((c,), np.float32)
    var = np.ones((c,), np.float32)
    scale = gamma / np.sqrt(var + eps)
    bias = beta - mean * scale                         # == 0 for these stats
    return scale, bias


def init_params(key, inplanes=8, n_layers=2, out_channels=3):
    """Raw parameters matching the PyTorch module's init_weights() (HWIO)."""
    params = {}
    k1, k2, k3, k4 = jax.random.split(key, 4)

    std1 = (2.0 / (5 * 5 * inplanes)) ** 0.5
    params["conv1_w"] = std1 * jax.random.normal(k1, (5, 5, 3, inplanes), jnp.float32)
    params["bn1"] = bn_fold(inplanes)

    blocks = []
    bkeys = jax.random.split(k2, 2 * n_layers)
    std3 = (2.0 / (3 * 3 * inplanes)) ** 0.5
    for l in range(n_layers):
        blocks.append({
            "w1": std3 * jax.random.normal(bkeys[2 * l], (3, 3, inplanes, inplanes), jnp.float32),
            "bn1": bn_fold(inplanes),
            "w2": std3 * jax.random.normal(bkeys[2 * l + 1], (3, 3, inplanes, inplanes), jnp.float32),
            "bn2": bn_fold(inplanes),
        })
    params["blocks"] = blocks

    std_out = (2.0 / (1 * 1 * out_channels)) ** 0.5
    params["conv_out_w"] = std_out * jax.random.normal(k3, (1, 1, inplanes, out_channels), jnp.float32)
    bound = 1.0 / (inplanes ** 0.5)
    params["conv_out_b"] = jax.random.uniform(k4, (out_channels,), jnp.float32, -bound, bound)
    return params


def prepare_kernel_params(params, *, batch, height, width, n_pad=128):
    """Fold eval-mode BN and pack ALL static operands into one f32 slab."""
    conv1_w = np.asarray(params["conv1_w"])            # (5,5,3,C) HWIO
    C = conv1_w.shape[-1]
    K1 = conv1_w.shape[0] * conv1_w.shape[1] * conv1_w.shape[2]
    out_w = np.asarray(params["conv_out_w"])            # (1,1,C,out_c)
    out_b = np.asarray(params["conv_out_b"])
    out_c = out_w.shape[-1]
    blocks = params["blocks"]
    n_convs = 2 * len(blocks)

    OH = (height + 2 * 2 - 5) // 4 + 1
    OW = (width + 2 * 2 - 5) // 4 + 1
    M = batch * OH * OW

    lay = _slab_layout(M, K1, C, n_convs, n_pad)
    slab = np.zeros((lay["rows"], n_pad), np.float32)

    # Per-tap row-validity masks, broadcast over C lanes, packed (M, 9*C).
    r = np.arange(OH * OW)
    oy, ox = r // OW, r % OW
    cols = []
    for dh in range(3):
        for dw in range(3):
            valid = ((oy + dh - 1 >= 0) & (oy + dh - 1 < OH) &
                     (ox + dw - 1 >= 0) & (ox + dw - 1 < OW)).astype(np.float32)
            cols.append(np.repeat(valid[:, None], C, axis=1))
    masks = np.tile(np.concatenate(cols, axis=1), (batch, 1))   # (M, 9*C)
    slab[lay["mask"]:lay["mask"] + M, :9 * C] = masks

    # conv1 weight with BN1 folded (folded bias is exactly zero for init stats).
    s1, _ = params["bn1"]
    slab[lay["w1"]:lay["w1"] + K1, :C] = conv1_w.reshape(K1, C) * s1[None, :]

    # BasicBlock conv weights, one (9*C, C) slab per conv, tap-major rows.
    row = lay["wb"]
    for blk in blocks:
        for wkey, bnkey in (("w1", "bn1"), ("w2", "bn2")):
            s, _ = blk[bnkey]
            w = np.asarray(blk[wkey]).reshape(9 * C, C) * s[None, :]
            slab[row:row + 9 * C, :C] = w
            row += 9 * C

    # conv_out weight/bias, zero-padded to n_pad lanes (lane-dense output).
    slab[lay["wo"]:lay["wo"] + C, :out_c] = out_w.reshape(C, out_c)
    slab[lay["bo"], :out_c] = out_b
    return jnp.asarray(slab)


def tiny_deco_forward(slab, x_nchw, *, inplanes, n_convs, out_c):
    B, Cin, H, W = x_nchw.shape
    C = inplanes
    n_pad = slab.shape[-1]

    # conv1 patches (only host-side im2col; everything else is in-kernel).
    x_nhwc = jnp.transpose(x_nchw, (0, 2, 3, 1))
    patches, OH, OW = _im2col(x_nhwc, ksize=5, stride=4, pad=2)  # (M, 75)
    M = B * OH * OW
    K1 = patches.shape[1]

    lay = _slab_layout(M, K1, C, n_convs, n_pad)
    assert lay["rows"] == slab.shape[0], (lay["rows"], slab.shape)

    # Lane-dense view of the raw input for the in-kernel ||input||^2.
    x_flat = x_nchw.reshape(B * Cin, H * W)

    # Static sublane shifts for the 9 taps of every 3x3 conv (roll amounts).
    offsets = [(dh - 1) * OW + (dw - 1) for dh in range(3) for dw in range(3)]
    tap_shifts = tuple(int((-o) % M) for o in offsets)

    kernel = functools.partial(
        _tiny_deco_kernel, n_convs=n_convs, C=C, M=M, K1=K1,
        out_c=out_c, n_pad=n_pad, lay=lay, tap_shifts=tap_shifts)

    y_flat = pl.pallas_call(
        kernel,
        out_shape=jax.ShapeDtypeStruct((M, n_pad), jnp.float32),
        grid=(1,),
        in_specs=[
            pl.BlockSpec((M, K1), lambda i: (0, 0)),              # conv1 patches
            pl.BlockSpec((B * Cin, H * W), lambda i: (0, 0)),     # raw input (norm)
            pl.BlockSpec((lay["rows"], n_pad), lambda i: (0, 0)), # packed statics
        ],
        out_specs=pl.BlockSpec((M, n_pad), lambda i: (0, 0)),
        compiler_params=pltpu.CompilerParams(
            dimension_semantics=("arbitrary",)),
    )(patches, x_flat, slab)

    ratio = y_flat[0, out_c]                                      # packed slot
    y = y_flat[:, :out_c].reshape(B, OH, OW, out_c).transpose(0, 3, 1, 2)
    return y, ratio


if __name__ == "__main__":
    key = jax.random.PRNGKey(0)
    kx, kp = jax.random.split(key)
    B, Cin, H, W = 2, 3, 16, 16
    x = jax.random.normal(kx, (B, Cin, H, W), jnp.float32)   # NCHW like PyTorch

    raw_params = init_params(kp, inplanes=8, n_layers=2, out_channels=3)
    slab = prepare_kernel_params(raw_params, batch=B, height=H, width=W)

    fwd = jax.jit(tiny_deco_forward,
                  static_argnames=("inplanes", "n_convs", "out_c"))
    y, ratio = fwd(slab, x, inplanes=8, n_convs=4, out_c=3)
    jax.block_until_ready((y, ratio))

    assert y.shape == (B, 3, 4, 4), y.shape
    assert bool(jnp.all(jnp.isfinite(y))) and bool(jnp.isfinite(ratio))
    print("KERNEL_OK")
</pallas_src>

<mosaic_0001>
module attributes {stable_mosaic.version = 11 : i64} {
  func.func @_tiny_deco_kernel(%arg0: i32, %arg1: memref<32x75xf32, #tpu.memory_space<vmem>>, %arg2: memref<6x256xf32, #tpu.memory_space<vmem>>, %arg3: memref<416x128xf32, #tpu.memory_space<vmem>>, %arg4: memref<32x128xf32, #tpu.memory_space<vmem>>) attributes {dimension_semantics = [#tpu.dimension_semantics<arbitrary>], iteration_bounds = array<i64: 1>, scalar_prefetch = 0 : i64, scratch_operands = 0 : i64, tpu.core_type = #tpu.core_type<tc>, window_params = [{pipeline_mode = #tpu.pipeline_mode<synchronous>, transform_indices = @transform_0, window_bounds = array<i64: 32, 75>}, {pipeline_mode = #tpu.pipeline_mode<synchronous>, transform_indices = @transform_1, window_bounds = array<i64: 6, 256>}, {pipeline_mode = #tpu.pipeline_mode<synchronous>, transform_indices = @transform_2, window_bounds = array<i64: 416, 128>}, {pipeline_mode = #tpu.pipeline_mode<synchronous>, transform_indices = @transform_3, window_bounds = array<i64: 32, 128>}]} {
    %c0 = arith.constant 0 : index
    %c0_0 = arith.constant 0 : index
    %0 = vector.load %arg3[%c0, %c0_0] : memref<416x128xf32, #tpu.memory_space<vmem>>, vector<32x72xf32>
    %c32 = arith.constant 32 : index
    %c0_1 = arith.constant 0 : index
    %1 = vector.load %arg3[%c32, %c0_1] : memref<416x128xf32, #tpu.memory_space<vmem>>, vector<75x8xf32>
    %c400 = arith.constant 400 : index
    %c0_2 = arith.constant 0 : index
    %2 = vector.load %arg3[%c400, %c0_2] : memref<416x128xf32, #tpu.memory_space<vmem>>, vector<8x128xf32>
    %c408 = arith.constant 408 : index
    %c0_3 = arith.constant 0 : index
    %3 = vector.load %arg3[%c408, %c0_3] : memref<416x128xf32, #tpu.memory_space<vmem>>, vector<1x128xf32>
    %c0_4 = arith.constant 0 : index
    %c0_5 = arith.constant 0 : index
    %4 = vector.load %arg1[%c0_4, %c0_5] : memref<32x75xf32, #tpu.memory_space<vmem>>, vector<32x75xf32>
    %cst = arith.constant dense<0.000000e+00> : vector<32x8xf32>
    %5 = tpu.matmul %4, %1, %cst {dimension_numbers = #tpu.dot_dimension_numbers<[1], [0], [0], [1], [0, 0, 1, 1], [], []>} : vector<32x75xf32>, vector<75x8xf32>, vector<32x8xf32> -> vector<32x8xf32>
    %cst_6 = arith.constant 0.000000e+00 : f32
    %6 = vector.broadcast %cst_6 : f32 to vector<32x8xf32>
    %7 = arith.maximumf %5, %6 : vector<32x8xf32>
    %c5_i32 = arith.constant 5 : i32
    %8 = tpu.dynamic_rotate %7 by %c5_i32 dim 0 : vector<32x8xf32>, i32 -> vector<32x8xf32>
    %c4_i32 = arith.constant 4 : i32
    %9 = tpu.dynamic_rotate %7 by %c4_i32 dim 0 : vector<32x8xf32>, i32 -> vector<32x8xf32>
    %c3_i32 = arith.constant 3 : i32
    %10 = tpu.dynamic_rotate %7 by %c3_i32 dim 0 : vector<32x8xf32>, i32 -> vector<32x8xf32>
    %c1_i32 = arith.constant 1 : i32
    %11 = tpu.dynamic_rotate %7 by %c1_i32 dim 0 : vector<32x8xf32>, i32 -> vector<32x8xf32>
    %c31_i32 = arith.constant 31 : i32
    %12 = tpu.dynamic_rotate %7 by %c31_i32 dim 0 : vector<32x8xf32>, i32 -> vector<32x8xf32>
    %c29_i32 = arith.constant 29 : i32
    %13 = tpu.dynamic_rotate %7 by %c29_i32 dim 0 : vector<32x8xf32>, i32 -> vector<32x8xf32>
    %c28_i32 = arith.constant 28 : i32
    %14 = tpu.dynamic_rotate %7 by %c28_i32 dim 0 : vector<32x8xf32>, i32 -> vector<32x8xf32>
    %c27_i32 = arith.constant 27 : i32
    %15 = tpu.dynamic_rotate %7 by %c27_i32 dim 0 : vector<32x8xf32>, i32 -> vector<32x8xf32>
    %16 = tpu.concatenate %8, %9, %10, %11, %7, %12, %13, %14, %15 in 1 : vector<32x8xf32>, vector<32x8xf32>, vector<32x8xf32>, vector<32x8xf32>, vector<32x8xf32>, vector<32x8xf32>, vector<32x8xf32>, vector<32x8xf32>, vector<32x8xf32> -> vector<32x72xf32>
    %17 = arith.mulf %16, %0 : vector<32x72xf32>
    %c112 = arith.constant 112 : index
    %c0_7 = arith.constant 0 : index
    %18 = vector.load %arg3[%c112, %c0_7] : memref<416x128xf32, #tpu.memory_space<vmem>>, vector<72x8xf32>
    %cst_8 = arith.constant dense<0.000000e+00> : vector<32x8xf32>
    %19 = tpu.matmul %17, %18, %cst_8 {dimension_numbers = #tpu.dot_dimension_numbers<[1], [0], [0], [1], [0, 0, 1, 1], [], []>} : vector<32x72xf32>, vector<72x8xf32>, vector<32x8xf32> -> vector<32x8xf32>
    %cst_9 = arith.constant 0.000000e+00 : f32
    %20 = vector.broadcast %cst_9 : f32 to vector<32x8xf32>
    %21 = arith.maximumf %19, %20 : vector<32x8xf32>
    %c5_i32_10 = arith.constant 5 : i32
    %22 = tpu.dynamic_rotate %21 by %c5_i32_10 dim 0 : vector<32x8xf32>, i32 -> vector<32x8xf32>
    %c4_i32_11 = arith.constant 4 : i32
    %23 = tpu.dynamic_rotate %21 by %c4_i32_11 dim 0 : vector<32x8xf32>, i32 -> vector<32x8xf32>
    %c3_i32_12 = arith.constant 3 : i32
    %24 = tpu.dynamic_rotate %21 by %c3_i32_12 dim 0 : vector<32x8xf32>, i32 -> vector<32x8xf32>
    %c1_i32_13 = arith.constant 1 : i32
    %25 = tpu.dynamic_rotate %21 by %c1_i32_13 dim 0 : vector<32x8xf32>, i32 -> vector<32x8xf32>
    %c31_i32_14 = arith.constant 31 : i32
    %26 = tpu.dynamic_rotate %21 by %c31_i32_14 dim 0 : vector<32x8xf32>, i32 -> vector<32x8xf32>
    %c29_i32_15 = arith.constant 29 : i32
    %27 = tpu.dynamic_rotate %21 by %c29_i32_15 dim 0 : vector<32x8xf32>, i32 -> vector<32x8xf32>
    %c28_i32_16 = arith.constant 28 : i32
    %28 = tpu.dynamic_rotate %21 by %c28_i32_16 dim 0 : vector<32x8xf32>, i32 -> vector<32x8xf32>
    %c27_i32_17 = arith.constant 27 : i32
    %29 = tpu.dynamic_rotate %21 by %c27_i32_17 dim 0 : vector<32x8xf32>, i32 -> vector<32x8xf32>
    %30 = tpu.concatenate %22, %23, %24, %25, %21, %26, %27, %28, %29 in 1 : vector<32x8xf32>, vector<32x8xf32>, vector<32x8xf32>, vector<32x8xf32>, vector<32x8xf32>, vector<32x8xf32>, vector<32x8xf32>, vector<32x8xf32>, vector<32x8xf32> -> vector<32x72xf32>
    %31 = arith.mulf %30, %0 : vector<32x72xf32>
    %c184 = arith.constant 184 : index
    %c0_18 = arith.constant 0 : index
    %32 = vector.load %arg3[%c184, %c0_18] : memref<416x128xf32, #tpu.memory_space<vmem>>, vector<72x8xf32>
    %cst_19 = arith.constant dense<0.000000e+00> : vector<32x8xf32>
    %33 = tpu.matmul %31, %32, %cst_19 {dimension_numbers = #tpu.dot_dimension_numbers<[1], [0], [0], [1], [0, 0, 1, 1], [], []>} : vector<32x72xf32>, vector<72x8xf32>, vector<32x8xf32> -> vector<32x8xf32>
    %34 = arith.addf %33, %7 : vector<32x8xf32>
    %cst_20 = arith.constant 0.000000e+00 : f32
    %35 = vector.broadcast %cst_20 : f32 to vector<32x8xf32>
    %36 = arith.maximumf %34, %35 : vector<32x8xf32>
    %c5_i32_21 = arith.constant 5 : i32
    %37 = tpu.dynamic_rotate %36 by %c5_i32_21 dim 0 : vector<32x8xf32>, i32 -> vector<32x8xf32>
    %c4_i32_22 = arith.constant 4 : i32
    %38 = tpu.dynamic_rotate %36 by %c4_i32_22 dim 0 : vector<32x8xf32>, i32 -> vector<32x8xf32>
    %c3_i32_23 = arith.constant 3 : i32
    %39 = tpu.dynamic_rotate %36 by %c3_i32_23 dim 0 : vector<32x8xf32>, i32 -> vector<32x8xf32>
    %c1_i32_24 = arith.constant 1 : i32
    %40 = tpu.dynamic_rotate %36 by %c1_i32_24 dim 0 : vector<32x8xf32>, i32 -> vector<32x8xf32>
    %c31_i32_25 = arith.constant 31 : i32
    %41 = tpu.dynamic_rotate %36 by %c31_i32_25 dim 0 : vector<32x8xf32>, i32 -> vector<32x8xf32>
    %c29_i32_26 = arith.constant 29 : i32
    %42 = tpu.dynamic_rotate %36 by %c29_i32_26 dim 0 : vector<32x8xf32>, i32 -> vector<32x8xf32>
    %c28_i32_27 = arith.constant 28 : i32
    %43 = tpu.dynamic_rotate %36 by %c28_i32_27 dim 0 : vector<32x8xf32>, i32 -> vector<32x8xf32>
    %c27_i32_28 = arith.constant 27 : i32
    %44 = tpu.dynamic_rotate %36 by %c27_i32_28 dim 0 : vector<32x8xf32>, i32 -> vector<32x8xf32>
    %45 = tpu.concatenate %37, %38, %39, %40, %36, %41, %42, %43, %44 in 1 : vector<32x8xf32>, vector<32x8xf32>, vector<32x8xf32>, vector<32x8xf32>, vector<32x8xf32>, vector<32x8xf32>, vector<32x8xf32>, vector<32x8xf32>, vector<32x8xf32> -> vector<32x72xf32>
    %46 = arith.mulf %45, %0 : vector<32x72xf32>
    %c256 = arith.constant 256 : index
    %c0_29 = arith.constant 0 : index
    %47 = vector.load %arg3[%c256, %c0_29] : memref<416x128xf32, #tpu.memory_space<vmem>>, vector<72x8xf32>
    %cst_30 = arith.constant dense<0.000000e+00> : vector<32x8xf32>
    %48 = tpu.matmul %46, %47, %cst_30 {dimension_numbers = #tpu.dot_dimension_numbers<[1], [0], [0], [1], [0, 0, 1, 1], [], []>} : vector<32x72xf32>, vector<72x8xf32>, vector<32x8xf32> -> vector<32x8xf32>
    %cst_31 = arith.constant 0.000000e+00 : f32
    %49 = vector.broadcast %cst_31 : f32 to vector<32x8xf32>
    %50 = arith.maximumf %48, %49 : vector<32x8xf32>
    %c5_i32_32 = arith.constant 5 : i32
    %51 = tpu.dynamic_rotate %50 by %c5_i32_32 dim 0 : vector<32x8xf32>, i32 -> vector<32x8xf32>
    %c4_i32_33 = arith.constant 4 : i32
    %52 = tpu.dynamic_rotate %50 by %c4_i32_33 dim 0 : vector<32x8xf32>, i32 -> vector<32x8xf32>
    %c3_i32_34 = arith.constant 3 : i32
    %53 = tpu.dynamic_rotate %50 by %c3_i32_34 dim 0 : vector<32x8xf32>, i32 -> vector<32x8xf32>
    %c1_i32_35 = arith.constant 1 : i32
    %54 = tpu.dynamic_rotate %50 by %c1_i32_35 dim 0 : vector<32x8xf32>, i32 -> vector<32x8xf32>
    %c31_i32_36 = arith.constant 31 : i32
    %55 = tpu.dynamic_rotate %50 by %c31_i32_36 dim 0 : vector<32x8xf32>, i32 -> vector<32x8xf32>
    %c29_i32_37 = arith.constant 29 : i32
    %56 = tpu.dynamic_rotate %50 by %c29_i32_37 dim 0 : vector<32x8xf32>, i32 -> vector<32x8xf32>
    %c28_i32_38 = arith.constant 28 : i32
    %57 = tpu.dynamic_rotate %50 by %c28_i32_38 dim 0 : vector<32x8xf32>, i32 -> vector<32x8xf32>
    %c27_i32_39 = arith.constant 27 : i32
    %58 = tpu.dynamic_rotate %50 by %c27_i32_39 dim 0 : vector<32x8xf32>, i32 -> vector<32x8xf32>
    %59 = tpu.concatenate %51, %52, %53, %54, %50, %55, %56, %57, %58 in 1 : vector<32x8xf32>, vector<32x8xf32>, vector<32x8xf32>, vector<32x8xf32>, vector<32x8xf32>, vector<32x8xf32>, vector<32x8xf32>, vector<32x8xf32>, vector<32x8xf32> -> vector<32x72xf32>
    %60 = arith.mulf %59, %0 : vector<32x72xf32>
    %c328 = arith.constant 328 : index
    %c0_40 = arith.constant 0 : index
    %61 = vector.load %arg3[%c328, %c0_40] : memref<416x128xf32, #tpu.memory_space<vmem>>, vector<72x8xf32>
    %cst_41 = arith.constant dense<0.000000e+00> : vector<32x8xf32>
    %62 = tpu.matmul %60, %61, %cst_41 {dimension_numbers = #tpu.dot_dimension_numbers<[1], [0], [0], [1], [0, 0, 1, 1], [], []>} : vector<32x72xf32>, vector<72x8xf32>, vector<32x8xf32> -> vector<32x8xf32>
    %63 = arith.addf %62, %36 : vector<32x8xf32>
    %cst_42 = arith.constant 0.000000e+00 : f32
    %64 = vector.broadcast %cst_42 : f32 to vector<32x8xf32>
    %65 = arith.maximumf %63, %64 : vector<32x8xf32>
    %cst_43 = arith.constant dense<0.000000e+00> : vector<32x128xf32>
    %66 = tpu.matmul %65, %2, %cst_43 {dimension_numbers = #tpu.dot_dimension_numbers<[1], [0], [0], [1], [0, 0, 1, 1], [], []>} : vector<32x8xf32>, vector<8x128xf32>, vector<32x128xf32> -> vector<32x128xf32>
    %67 = vector.broadcast %3 : vector<1x128xf32> to vector<32x128xf32>
    %68 = arith.addf %66, %67 : vector<32x128xf32>
    %69 = arith.mulf %68, %68 : vector<32x128xf32>
    %70 = vector.shape_cast %69 : vector<32x128xf32> to vector<1x32x128xf32>
    %cst_44 = arith.constant dense<0.000000e+00> : vector<1xf32>
    %71 = vector.multi_reduction <add>, %70, %cst_44 [1, 2] : vector<1x32x128xf32> to vector<1xf32>
    %72 = vector.shape_cast %71 : vector<1xf32> to vector<1x1x1xf32>
    %73 = vector.extract %72[0, 0, 0] : f32 from vector<1x1x1xf32>
    %74 = vector.broadcast %73 : f32 to vector<1x1xf32>
    %c0_45 = arith.constant 0 : index
    %c0_46 = arith.constant 0 : index
    %75 = vector.load %arg2[%c0_45, %c0_46] : memref<6x256xf32, #tpu.memory_space<vmem>>, vector<6x256xf32>
    %76 = arith.mulf %75, %75 : vector<6x256xf32>
    %77 = vector.shape_cast %76 : vector<6x256xf32> to vector<1x6x256xf32>
    %cst_47 = arith.constant dense<0.000000e+00> : vector<1xf32>
    %78 = vector.multi_reduction <add>, %77, %cst_47 [1, 2] : vector<1x6x256xf32> to vector<1xf32>
    %79 = vector.shape_cast %78 : vector<1xf32> to vector<1x1x1xf32>
    %80 = vector.extract %79[0, 0, 0] : f32 from vector<1x1x1xf32>
    %81 = vector.broadcast %80 : f32 to vector<1x1xf32>
    %82 = arith.divf %81, %74 : vector<1x1xf32>
    %83 = math.sqrt %82 : vector<1x1xf32>
    %84 = tpu.iota {dimensions = array<i32: 0>} : vector<32x128xi32>
    %85 = tpu.iota {dimensions = array<i32: 1>} : vector<32x128xi32>
    %c0_i32 = arith.constant 0 : i32
    %86 = vector.broadcast %c0_i32 : i32 to vector<32x128xi32>
    %87 = arith.cmpi eq, %84, %86 : vector<32x128xi32>
    %c3_i32_48 = arith.constant 3 : i32
    %88 = vector.broadcast %c3_i32_48 : i32 to vector<32x128xi32>
    %89 = arith.cmpi eq, %85, %88 : vector<32x128xi32>
    %90 = arith.andi %87, %89 : vector<32x128xi1>
    %91 = math.tanh %68 : vector<32x128xf32>
    %92 = vector.shape_cast %83 : vector<1x1xf32> to vector<1x1xf32>
    %93 = vector.broadcast %92 : vector<1x1xf32> to vector<32x128xf32>
    %94 = arith.select %90, %93, %91 : vector<32x128xi1>, vector<32x128xf32>
    %c0_49 = arith.constant 0 : index
    %c0_50 = arith.constant 0 : index
    %95 = vector.load %arg4[%c0_49, %c0_50] : memref<32x128xf32, #tpu.memory_space<vmem>>, vector<32x128xf32>
    tpu.vector_store %arg4[%c0_49, %c0_50], %94 {strides = array<i32>} : memref<32x128xf32, #tpu.memory_space<vmem>>, vector<32x128xf32>,
    return
  }
  func.func @transform_0(%arg0: i32) -> (i32, i32) {
    %c0_i32 = arith.constant 0 : i32
    %c0_i32_0 = arith.constant 0 : i32
    %c0_i32_1 = arith.constant 0 : i32
    return %c0_i32, %c0_i32_0 : i32, i32
  }
  func.func @transform_1(%arg0: i32) -> (i32, i32) {
    %c0_i32 = arith.constant 0 : i32
    %c0_i32_0 = arith.constant 0 : i32
    %c0_i32_1 = arith.constant 0 : i32
    return %c0_i32, %c0_i32_0 : i32, i32
  }
  func.func @transform_2(%arg0: i32) -> (i32, i32) {
    %c0_i32 = arith.constant 0 : i32
    %c0_i32_0 = arith.constant 0 : i32
    %c0_i32_1 = arith.constant 0 : i32
    return %c0_i32, %c0_i32_0 : i32, i32
  }
  func.func @transform_3(%arg0: i32) -> (i32, i32) {
    %c0_i32 = arith.constant 0 : i32
    %c0_i32_0 = arith.constant 0 : i32
    %c0_i32_1 = arith.constant 0 : i32
    return %c0_i32, %c0_i32_0 : i32, i32
  }
}

</mosaic_0001>

<llo_original>
// kernel: tiny_deco_forward.1
$region0: #{tiny_deco_forward.1}
  #allocation0 [shape = 'u32[]', space=smem, size = 0x4, offset = 0x4, fixed_abs, tag = 'smem constant byte address 0x4 - core index']
  #allocation1 [shape = 'u32[144,128]{1,0:T(1,128)}', space=vmem, size = 0x12000, scoped, tag = 'internal scratch']
  %s0 = inlined_call_operand.vmem [shape: f32[32,75], index: 0, kind: input, shape index: {}]
  %s1 = inlined_call_operand.vmem [shape: f32[6,256], index: 1, kind: input, shape index: {}]
  %s2 = inlined_call_operand.vmem [shape: f32[416,128], index: 2, kind: input, shape index: {}]
  %s3 = inlined_call_operand.vmem [shape: f32[32,128], index: 3, kind: output, shape index: {}]
  %s4 = sld [smem:[#allocation0]]
  $region22: #{tiny_deco_forward.1} parent=0
    _
  %s6 = ssub.s32 1, %s4
  %s7 = scalar_select 0, %s6, %s4
  // Predicated region
  $region2: #{tiny_deco_forward.1} parent=0 // pred_check
    _
  $region3: #{tiny_deco_forward.1} parent=0 // pred_check_branch
    %9 = sbr.rel (0) target = $region5
  $region4: #{tiny_deco_forward.1} parent=0 // pred_region
    _
  $region5: #{tiny_deco_forward.1} parent=0 // pred_fallthru
    _
  // Predicated region
  $region6: #{tiny_deco_forward.1} parent=0 // pred_check
    _
  $region7: #{tiny_deco_forward.1} parent=0 // pred_check_branch
    %11 = sbr.rel (0) target = $region9
  $region8: #{tiny_deco_forward.1} parent=0 // pred_region
    _
  $region9: #{tiny_deco_forward.1} parent=0 // pred_fallthru
    _
  // Predicated region
  $region10: #{tiny_deco_forward.1} parent=0 // pred_check
    _
  $region11: #{tiny_deco_forward.1} parent=0 // pred_check_branch
    %13 = sbr.rel (0) target = $region13
  $region12: #{tiny_deco_forward.1} parent=0 // pred_region
    _
  $region13: #{tiny_deco_forward.1} parent=0 // pred_fallthru
    _
  %v14 = vld [vmem:[%s2] sm:$0xff]
  %v15 = vld [vmem:[%s2 + $0x8] sm:$0xff]
  %v16 = vld [vmem:[%s2 + $0x10] sm:$0xff]
  %v17 = vld [vmem:[%s2 + $0x18] sm:$0xff]
  %v18 = vld [vmem:[%s2 + $0x20] sm:$0xff]
  %v19 = vld [vmem:[%s2 + $0x28] sm:$0xff]
  %v20 = vld [vmem:[%s2 + $0x30] sm:$0xff]
  %v21 = vld [vmem:[%s2 + $0x38] sm:$0xff]
  %v22 = vld [vmem:[%s2 + $0x40] sm:$0xff]
  %v23 = vld [vmem:[%s2 + $0x48] sm:$0xff]
  %v24 = vld [vmem:[%s2 + $0x50] sm:$0xff]
  %v25 = vld [vmem:[%s2 + $0x58] sm:$0xff]
  %v26 = vld [vmem:[%s2 + $0x60] sm:$0xff]
  %v27 = vld [vmem:[%s2 + $0x68] sm:$0x7]
  %v28 = vld [vmem:[%s2 + $0x190] sm:$0xff]
  %v29 = vld [vmem:[%s2 + $0x198] sm:$0x1]
  %v30 = vld [vmem:[%s0] sm:$0xff]
  %v31 = vld [vmem:[%s0 + $0x8] sm:$0xff]
  %v32 = vld [vmem:[%s0 + $0x10] sm:$0xff]
  %v33 = vld [vmem:[%s0 + $0x18] sm:$0xff]
  %vm34 = vcmask 613376
  %v36 = vsel %vm34, %v30, 0
  %v39 = vsel %vm34, %v31, 0
  %v42 = vsel %vm34, %v32, 0
  %v45 = vsel %vm34, %v33, 0
  %vm47 = vcmask 1042432
  %v49 = vsel %vm47, %v27, 0
  %51 = vmatprep.subr.mxu0 0.0
  %52 = vmatpush1.msra.mxu0 %v18
  %53 = vmatprep.subr.mxu0 0.0
  %54 = vmatpush1.msra.mxu0 %v19
  %55 = vmatprep.subr.mxu0 0.0
  %56 = vmatpush1.msra.mxu0 %v20
  %57 = vmatprep.subr.mxu0 0.0
  %58 = vmatpush1.msra.mxu0 %v21
  %59 = vmatprep.subr.mxu0 0.0
  %60 = vmatpush1.msra.mxu0 %v22
  %61 = vmatprep.subr.mxu0 0.0
  %62 = vmatpush1.msra.mxu0 %v23
  %63 = vmatprep.subr.mxu0 0.0
  %64 = vmatpush1.msra.mxu0 %v24
  %65 = vmatprep.subr.mxu0 0.0
  %66 = vmatpush1.msra.mxu0 %v25
  %67 = vmatprep.subr.mxu0 0.0
  %68 = vmatpush1.msra.mxu0 %v26
  %69 = vmatprep.subr.mxu0 0.0
  %70 = vmatpush1.msra.mxu0 %v49
  %71 = vmatprep.subr.mxu0 0.0
  %72 = vmatpush1.msra.mxu0 0.0
  %73 = vmatprep.subr.mxu0 0.0
  %74 = vmatpush1.msra.mxu0 0.0
  %75 = vmatprep.subr.mxu0 0.0
  %76 = vmatpush1.msra.mxu0 0.0
  %77 = vmatprep.subr.mxu0 0.0
  %78 = vmatpush1.msra.mxu0 0.0
  %79 = vmatprep.subr.mxu0 0.0
  %80 = vmatpush1.msra.mxu0 0.0
  %81 = vmatprep.subr.mxu0 0.0
  %82 = vmatpush1.msra.mxu0 0.0
  %83 = vmatprep.subr.mxu0 0.0
  %84 = vmatpush1.msra.mxu0 0.0
  %85 = vmatprep.subr.mxu0 0.0
  %86 = vmatpush1.msra.mxu0 0.0
  %87 = vmatprep.subr.mxu0 0.0
  %88 = vmatpush1.msra.mxu0 0.0
  %89 = vmatprep.subr.mxu0 0.0
  %90 = vmatpush1.msra.mxu0 0.0
  %91 = vmatprep.subr.mxu0 0.0
  %92 = vmatpush1.msra.mxu0 0.0
  %93 = vmatprep.subr.mxu0 0.0
  %94 = vmatpush1.msra.mxu0 0.0
  %95 = vmatprep.subr.mxu0 0.0
  %96 = vmatpush1.msra.mxu0 0.0
  %97 = vmatprep.subr.mxu0 0.0
  %98 = vmatpush1.msra.mxu0 0.0
  %99 = vmatprep.subr.mxu0 0.0
  %100 = vmatpush1.msra.mxu0 0.0
  %101 = vmatprep.subr.mxu0 0.0
  %102 = vmatpush1.msra.mxu0 0.0
  %103 = vmatprep.subr.mxu0 0.0
  %104 = vmatpush1.msra.mxu0 0.0
  %105 = vmatprep.subr.mxu0 0.0
  %106 = vmatpush1.msra.mxu0 0.0
  %107 = vmatprep.subr.mxu0 0.0
  %108 = vmatpush1.msra.mxu0 0.0
  %109 = vmatprep.subr.mxu0 0.0
  %110 = vmatpush1.msra.mxu0 0.0
  %111 = vmatprep.subr.mxu0 0.0
  %112 = vmatpush1.msra.mxu0 0.0
  %113 = vmatprep.subr.mxu0 0.0
  %114 = vmatpush1.msra.mxu0 0.0
  %115 = vmatprep.mubr.f32.mxu0 0.0
  %116 = vmatmul.mubr.f32.gmra.mrb[0].mxu0 %v36
  %v117 = vpop.f32.mrb[0].mxu0
  %v118 = vadd.f32 0.0, %v117
  %v119 = vpop.f32.mrb[0].mxu0
  %120 = vmatprep.mubr.f32.mxu0 0.0
  %121 = vmatmul.mubr.f32.gmra.mrb[0].mxu0 %v39
  %v122 = vpop.f32.mrb[0].mxu0
  %v123 = vadd.f32 0.0, %v122
  %v124 = vpop.f32.mrb[0].mxu0
  %125 = vmatprep.mubr.f32.mxu0 0.0
  %126 = vmatmul.mubr.f32.gmra.mrb[0].mxu0 %v42
  %v127 = vpop.f32.mrb[0].mxu0
  %v128 = vadd.f32 0.0, %v127
  %v129 = vpop.f32.mrb[0].mxu0
  %130 = vmatprep.mubr.f32.mxu0 0.0
  %131 = vmatmul.mubr.f32.gmra.mrb[0].mxu0 %v45
  %v132 = vpop.f32.mrb[0].mxu0
  %v133 = vadd.f32 0.0, %v132
  %v134 = vpop.f32.mrb[0].mxu0
  %135 = vdwg.mxu0
  %v136 = vmax.f32 %v118, 0.0
  %v137 = vmax.f32 %v123, 0.0
  %v138 = vmax.f32 %v128, 0.0
  %v139 = vmax.f32 %v133, 0.0
  %v140 = vrot.slane %v136, 3
  %v141 = vrot.slane %v137, 3
  %v142 = vrot.slane %v138, 3
  %v143 = vrot.slane %v139, 3
  %v144 = vlaneseq
  %v145 = vshrl.u32 %v144, 7
  %vm146 = vcmp.lt.s32.totalorder %v145, 5
  %v147 = vsel %vm146, %v142, %v143
  %v148 = vsel %vm146, %v141, %v142
  %v149 = vsel %vm146, %v140, %v141
  %v150 = vsel %vm146, %v143, %v140
  %v151 = vrot.slane %v136, 4
  %v152 = vrot.slane %v137, 4
  %v153 = vrot.slane %v138, 4
  %v154 = vrot.slane %v139, 4
  %vm155 = vcmp.lt.s32.totalorder %v145, 4
  %v156 = vsel %vm155, %v153, %v154
  %v157 = vsel %vm155, %v152, %v153
  %v158 = vsel %vm155, %v151, %v152
  %v159 = vsel %vm155, %v154, %v151
  %v160 = vrot.slane %v136, 5
  %v161 = vrot.slane %v137, 5
  %v162 = vrot.slane %v138, 5
  %v163 = vrot.slane %v139, 5
  %vm164 = vcmp.lt.s32.totalorder %v145, 3
  %v165 = vsel %vm164, %v162, %v163
  %v166 = vsel %vm164, %v161, %v162
  %v167 = vsel %vm164, %v160, %v161
  %v168 = vsel %vm164, %v163, %v160
  %v169 = vrot.slane %v136, 7
  %v170 = vrot.slane %v137, 7
  %v171 = vrot.slane %v138, 7
  %v172 = vrot.slane %v139, 7
  %vm173 = vcmp.lt.s32.totalorder %v145, 1
  %v174 = vsel %vm173, %v171, %v172
  %v175 = vsel %vm173, %v170, %v171
  %v176 = vsel %vm173, %v169, %v170
  %v177 = vsel %vm173, %v172, %v169
  %v178 = vrot.slane %v136, 1
  %v179 = vrot.slane %v137, 1
  %v180 = vrot.slane %v138, 1
  %v181 = vrot.slane %v139, 1
  %vm182 = vcmp.lt.s32.totalorder %v145, 7
  %v183 = vsel %vm182, %v180, %v181
  %v184 = vsel %vm182, %v179, %v180
  %v185 = vsel %vm182, %v178, %v179
  %v186 = vsel %vm182, %v181, %v178
  %191 = vrot.lane.b32.xlu0 %v159, 8
  %v192 = vpop.permute.xlu0 %191
  %193 = vrot.lane.b32.xlu0 %v158, 8
  %v194 = vpop.permute.xlu0 %193
  %195 = vrot.lane.b32.xlu0 %v157, 8
  %v196 = vpop.permute.xlu0 %195
  %197 = vrot.lane.b32.xlu0 %v156, 8
  %v198 = vpop.permute.xlu0 %197
  %207 = vrot.lane.b32.xlu0 %v168, 16
  %v208 = vpop.permute.xlu0 %207
  %209 = vrot.lane.b32.xlu0 %v167, 16
  %v210 = vpop.permute.xlu0 %209
  %211 = vrot.lane.b32.xlu0 %v166, 16
  %v212 = vpop.permute.xlu0 %211
  %213 = vrot.lane.b32.xlu0 %v165, 16
  %v214 = vpop.permute.xlu0 %213
  %223 = vrot.lane.b32.xlu0 %v177, 24
  %v224 = vpop.permute.xlu0 %223
  %225 = vrot.lane.b32.xlu0 %v176, 24
  %v226 = vpop.permute.xlu0 %225
  %227 = vrot.lane.b32.xlu0 %v175, 24
  %v228 = vpop.permute.xlu0 %227
  %229 = vrot.lane.b32.xlu0 %v174, 24
  %v230 = vpop.permute.xlu0 %229
  %239 = vrot.lane.b32.xlu0 %v136, 32
  %v240 = vpop.permute.xlu0 %239
  %241 = vrot.lane.b32.xlu0 %v137, 32
  %v242 = vpop.permute.xlu0 %241
  %243 = vrot.lane.b32.xlu0 %v138, 32
  %v244 = vpop.permute.xlu0 %243
  %245 = vrot.lane.b32.xlu0 %v139, 32
  %v246 = vpop.permute.xlu0 %245
  %255 = vrot.lane.b32.xlu0 %v185, 40
  %v256 = vpop.permute.xlu0 %255
  %257 = vrot.lane.b32.xlu0 %v184, 40
  %v258 = vpop.permute.xlu0 %257
  %259 = vrot.lane.b32.xlu0 %v183, 40
  %v260 = vpop.permute.xlu0 %259
  %261 = vrot.lane.b32.xlu0 %v186, 40
  %v262 = vpop.permute.xlu0 %261
  %271 = vrot.lane.b32.xlu0 %v149, 48
  %v272 = vpop.permute.xlu0 %271
  %273 = vrot.lane.b32.xlu0 %v148, 48
  %v274 = vpop.permute.xlu0 %273
  %275 = vrot.lane.b32.xlu0 %v147, 48
  %v276 = vpop.permute.xlu0 %275
  %277 = vrot.lane.b32.xlu0 %v150, 48
  %v278 = vpop.permute.xlu0 %277
  %283 = vrot.lane.b32.xlu0 %v158, 56
  %v284 = vpop.permute.xlu0 %283
  %285 = vrot.lane.b32.xlu0 %v157, 56
  %v286 = vpop.permute.xlu0 %285
  %287 = vrot.lane.b32.xlu0 %v156, 56
  %v288 = vpop.permute.xlu0 %287
  %289 = vrot.lane.b32.xlu0 %v159, 56
  %v290 = vpop.permute.xlu0 %289
  %295 = vrot.lane.b32.xlu0 %v167, 64
  %v296 = vpop.permute.xlu0 %295
  %297 = vrot.lane.b32.xlu0 %v166, 64
  %v298 = vpop.permute.xlu0 %297
  %299 = vrot.lane.b32.xlu0 %v165, 64
  %v300 = vpop.permute.xlu0 %299
  %301 = vrot.lane.b32.xlu0 %v168, 64
  %v302 = vpop.permute.xlu0 %301
  %vm307 = vcmask 64512
  %v308 = vsel %vm307, %v150, %v192
  %v309 = vsel %vm307, %v149, %v194
  %v310 = vsel %vm307, %v148, %v196
  %v311 = vsel %vm307, %v147, %v198
  %vm312 = vcmask 130048
  %v313 = vsel %vm312, %v308, %v208
  %v314 = vsel %vm312, %v309, %v210
  %v315 = vsel %vm312, %v310, %v212
  %v316 = vsel %vm312, %v311, %v214
  %vm317 = vcmask 195584
  %v318 = vsel %vm317, %v313, %v224
  %v319 = vsel %vm317, %v314, %v226
  %v320 = vsel %vm317, %v315, %v228
  %v321 = vsel %vm317, %v316, %v230
  %vm322 = vcmask 261120
  %v323 = vsel %vm322, %v318, %v240
  %v324 = vsel %vm322, %v319, %v242
  %v325 = vsel %vm322, %v320, %v244
  %v326 = vsel %vm322, %v321, %v246
  %vm327 = vcmask 326656
  %v328 = vsel %vm327, %v323, %v256
  %v329 = vsel %vm327, %v324, %v258
  %v330 = vsel %vm327, %v325, %v260
  %v331 = vsel %vm327, %v326, %v262
  %vm332 = vcmask 392192
  %v333 = vsel %vm332, %v328, %v272
  %v334 = vsel %vm332, %v329, %v274
  %v335 = vsel %vm332, %v330, %v276
  %v336 = vsel %vm332, %v331, %v278
  %vm337 = vcmask 457728
  %v338 = vsel %vm337, %v333, %v284
  %v339 = vsel %vm337, %v334, %v286
  %v340 = vsel %vm337, %v335, %v288
  %v341 = vsel %vm337, %v336, %v290
  %vm342 = vcmask 523264
  %v343 = vsel %vm342, %v338, %v296
  %v344 = vsel %vm342, %v339, %v298
  %v345 = vsel %vm342, %v340, %v300
  %v346 = vsel %vm342, %v341, %v302
  %v347 = vmul.f32 %v343, %v14
  %v348 = vmul.f32 %v344, %v15
  %v349 = vmul.f32 %v345, %v16
  %v350 = vmul.f32 %v346, %v17
  %v351 = vld [vmem:[%s2 + $0x70] sm:$0xff]
  %v352 = vld [vmem:[%s2 + $0x78] sm:$0xff]
  %v353 = vld [vmem:[%s2 + $0x80] sm:$0xff]
  %v354 = vld [vmem:[%s2 + $0x88] sm:$0xff]
  %v355 = vld [vmem:[%s2 + $0x90] sm:$0xff]
  %v356 = vld [vmem:[%s2 + $0x98] sm:$0xff]
  %v357 = vld [vmem:[%s2 + $0xa0] sm:$0xff]
  %v358 = vld [vmem:[%s2 + $0xa8] sm:$0xff]
  %v359 = vld [vmem:[%s2 + $0xb0] sm:$0xff]
  %vm360 = vcmask 588800
  %v362 = vsel %vm360, %v347, 0
  %v365 = vsel %vm360, %v348, 0
  %v368 = vsel %vm360, %v349, 0
  %v371 = vsel %vm360, %v350, 0
  %373 = vmatprep.subr.mxu0 0.0
  %374 = vmatpush1.msra.mxu0 %v351
  %375 = vmatprep.subr.mxu0 0.0
  %376 = vmatpush1.msra.mxu0 %v352
  %377 = vmatprep.subr.mxu0 0.0
  %378 = vmatpush1.msra.mxu0 %v353
  %379 = vmatprep.subr.mxu0 0.0
  %380 = vmatpush1.msra.mxu0 %v354
  %381 = vmatprep.subr.mxu0 0.0
  %382 = vmatpush1.msra.mxu0 %v355
  %383 = vmatprep.subr.mxu0 0.0
  %384 = vmatpush1.msra.mxu0 %v356
  %385 = vmatprep.subr.mxu0 0.0
  %386 = vmatpush1.msra.mxu0 %v357
  %387 = vmatprep.subr.mxu0 0.0
  %388 = vmatpush1.msra.mxu0 %v358
  %389 = vmatprep.subr.mxu0 0.0
  %390 = vmatpush1.msra.mxu0 %v359
  %391 = vmatprep.subr.mxu0 0.0
  %392 = vmatpush1.msra.mxu0 0.0
  %393 = vmatprep.subr.mxu0 0.0
  %394 = vmatpush1.msra.mxu0 0.0
  %395 = vmatprep.subr.mxu0 0.0
  %396 = vmatpush1.msra.mxu0 0.0
  %397 = vmatprep.subr.mxu0 0.0
  %398 = vmatpush1.msra.mxu0 0.0
  %399 = vmatprep.subr.mxu0 0.0
  %400 = vmatpush1.msra.mxu0 0.0
  %401 = vmatprep.subr.mxu0 0.0
  %402 = vmatpush1.msra.mxu0 0.0
  %403 = vmatprep.subr.mxu0 0.0
  %404 = vmatpush1.msra.mxu0 0.0
  %405 = vmatprep.subr.mxu0 0.0
  %406 = vmatpush1.msra.mxu0 0.0
  %407 = vmatprep.subr.mxu0 0.0
  %408 = vmatpush1.msra.mxu0 0.0
  %409 = vmatprep.subr.mxu0 0.0
  %410 = vmatpush1.msra.mxu0 0.0
  %411 = vmatprep.subr.mxu0 0.0
  %412 = vmatpush1.msra.mxu0 0.0
  %413 = vmatprep.subr.mxu0 0.0
  %414 = vmatpush1.msra.mxu0 0.0
  %415 = vmatprep.subr.mxu0 0.0
  %416 = vmatpush1.msra.mxu0 0.0
  %417 = vmatprep.subr.mxu0 0.0
  %418 = vmatpush1.msra.mxu0 0.0
  %419 = vmatprep.subr.mxu0 0.0
  %420 = vmatpush1.msra.mxu0 0.0
  %421 = vmatprep.subr.mxu0 0.0
  %422 = vmatpush1.msra.mxu0 0.0
  %423 = vmatprep.subr.mxu0 0.0
  %424 = vmatpush1.msra.mxu0 0.0
  %425 = vmatprep.subr.mxu0 0.0
  %426 = vmatpush1.msra.mxu0 0.0
  %427 = vmatprep.subr.mxu0 0.0
  %428 = vmatpush1.msra.mxu0 0.0
  %429 = vmatprep.subr.mxu0 0.0
  %430 = vmatpush1.msra.mxu0 0.0
  %431 = vmatprep.subr.mxu0 0.0
  %432 = vmatpush1.msra.mxu0 0.0
  %433 = vmatprep.subr.mxu0 0.0
  %434 = vmatpush1.msra.mxu0 0.0
  %435 = vmatprep.subr.mxu0 0.0
  %436 = vmatpush1.msra.mxu0 0.0
  %437 = vmatprep.mubr.f32.mxu0 0.0
  %438 = vmatmul.mubr.f32.gmra.mrb[0].mxu0 %v362
  %v439 = vpop.f32.mrb[0].mxu0
  %v440 = vadd.f32 0.0, %v439
  %v441 = vpop.f32.mrb[0].mxu0
  %442 = vmatprep.mubr.f32.mxu0 0.0
  %443 = vmatmul.mubr.f32.gmra.mrb[0].mxu0 %v365
  %v444 = vpop.f32.mrb[0].mxu0
  %v445 = vadd.f32 0.0, %v444
  %v446 = vpop.f32.mrb[0].mxu0
  %447 = vmatprep.mubr.f32.mxu0 0.0
  %448 = vmatmul.mubr.f32.gmra.mrb[0].mxu0 %v368
  %v449 = vpop.f32.mrb[0].mxu0
  %v450 = vadd.f32 0.0, %v449
  %v451 = vpop.f32.mrb[0].mxu0
  %452 = vmatprep.mubr.f32.mxu0 0.0
  %453 = vmatmul.mubr.f32.gmra.mrb[0].mxu0 %v371
  %v454 = vpop.f32.mrb[0].mxu0
  %v455 = vadd.f32 0.0, %v454
  %v456 = vpop.f32.mrb[0].mxu0
  %457 = vdwg.mxu0
  %v458 = vmax.f32 %v440, 0.0
  %v459 = vmax.f32 %v445, 0.0
  %v460 = vmax.f32 %v450, 0.0
  %v461 = vmax.f32 %v455, 0.0
  %v462 = vrot.slane %v458, 3
  %v463 = vrot.slane %v459, 3
  %v464 = vrot.slane %v460, 3
  %v465 = vrot.slane %v461, 3
  %v466 = vsel %vm146, %v464, %v465
  %v467 = vsel %vm146, %v463, %v464
  %v468 = vsel %vm146, %v462, %v463
  %v469 = vsel %vm146, %v465, %v462
  %v470 = vrot.slane %v458, 4
  %v471 = vrot.slane %v459, 4
  %v472 = vrot.slane %v460, 4
  %v473 = vrot.slane %v461, 4
  %v474 = vsel %vm155, %v472, %v473
  %v475 = vsel %vm155, %v471, %v472
  %v476 = vsel %vm155, %v470, %v471
  %v477 = vsel %vm155, %v473, %v470
  %v478 = vrot.slane %v458, 5
  %v479 = vrot.slane %v459, 5
  %v480 = vrot.slane %v460, 5
  %v481 = vrot.slane %v461, 5
  %v482 = vsel %vm164, %v480, %v481
  %v483 = vsel %vm164, %v479, %v480
  %v484 = vsel %vm164, %v478, %v479
  %v485 = vsel %vm164, %v481, %v478
  %v486 = vrot.slane %v458, 7
  %v487 = vrot.slane %v459, 7
  %v488 = vrot.slane %v460, 7
  %v489 = vrot.slane %v461, 7
  %v490 = vsel %vm173, %v488, %v489
  %v491 = vsel %vm173, %v487, %v488
  %v492 = vsel %vm173, %v486, %v487
  %v493 = vsel %vm173, %v489, %v486
  %v494 = vrot.slane %v458, 1
  %v495 = vrot.slane %v459, 1
  %v496 = vrot.slane %v460, 1
  %v497 = vrot.slane %v461, 1
  %v498 = vsel %vm182, %v496, %v497
  %v499 = vsel %vm182, %v495, %v496
  %v500 = vsel %vm182, %v494, %v495
  %v501 = vsel %vm182, %v497, %v494
  %506 = vrot.lane.b32.xlu0 %v477, 8
  %v507 = vpop.permute.xlu0 %506
  %508 = vrot.lane.b32.xlu0 %v476, 8
  %v509 = vpop.permute.xlu0 %508
  %510 = vrot.lane.b32.xlu0 %v475, 8
  %v511 = vpop.permute.xlu0 %510
  %512 = vrot.lane.b32.xlu0 %v474, 8
  %v513 = vpop.permute.xlu0 %512
  %522 = vrot.lane.b32.xlu0 %v485, 16
  %v523 = vpop.permute.xlu0 %522
  %524 = vrot.lane.b32.xlu0 %v484, 16
  %v525 = vpop.permute.xlu0 %524
  %526 = vrot.lane.b32.xlu0 %v483, 16
  %v527 = vpop.permute.xlu0 %526
  %528 = vrot.lane.b32.xlu0 %v482, 16
  %v529 = vpop.permute.xlu0 %528
  %538 = vrot.lane.b32.xlu0 %v493, 24
  %v539 = vpop.permute.xlu0 %538
  %540 = vrot.lane.b32.xlu0 %v492, 24
  %v541 = vpop.permute.xlu0 %540
  %542 = vrot.lane.b32.xlu0 %v491, 24
  %v543 = vpop.permute.xlu0 %542
  %544 = vrot.lane.b32.xlu0 %v490, 24
  %v545 = vpop.permute.xlu0 %544
  %554 = vrot.lane.b32.xlu0 %v458, 32
  %v555 = vpop.permute.xlu0 %554
  %556 = vrot.lane.b32.xlu0 %v459, 32
  %v557 = vpop.permute.xlu0 %556
  %558 = vrot.lane.b32.xlu0 %v460, 32
  %v559 = vpop.permute.xlu0 %558
  %560 = vrot.lane.b32.xlu0 %v461, 32
  %v561 = vpop.permute.xlu0 %560
  %570 = vrot.lane.b32.xlu0 %v500, 40
  %v571 = vpop.permute.xlu0 %570
  %572 = vrot.lane.b32.xlu0 %v499, 40
  %v573 = vpop.permute.xlu0 %572
  %574 = vrot.lane.b32.xlu0 %v498, 40
  %v575 = vpop.permute.xlu0 %574
  %576 = vrot.lane.b32.xlu0 %v501, 40
  %v577 = vpop.permute.xlu0 %576
  %586 = vrot.lane.b32.xlu0 %v468, 48
  %v587 = vpop.permute.xlu0 %586
  %588 = vrot.lane.b32.xlu0 %v467, 48
  %v589 = vpop.permute.xlu0 %588
  %590 = vrot.lane.b32.xlu0 %v466, 48
  %v591 = vpop.permute.xlu0 %590
  %592 = vrot.lane.b32.xlu0 %v469, 48
  %v593 = vpop.permute.xlu0 %592
  %598 = vrot.lane.b32.xlu0 %v476, 56
  %v599 = vpop.permute.xlu0 %598
  %600 = vrot.lane.b32.xlu0 %v475, 56
  %v601 = vpop.permute.xlu0 %600
  %602 = vrot.lane.b32.xlu0 %v474, 56
  %v603 = vpop.permute.xlu0 %602
  %604 = vrot.lane.b32.xlu0 %v477, 56
  %v605 = vpop.permute.xlu0 %604
  %610 = vrot.lane.b32.xlu0 %v484, 64
  %v611 = vpop.permute.xlu0 %610
  %612 = vrot.lane.b32.xlu0 %v483, 64
  %v613 = vpop.permute.xlu0 %612
  %614 = vrot.lane.b32.xlu0 %v482, 64
  %v615 = vpop.permute.xlu0 %614
  %616 = vrot.lane.b32.xlu0 %v485, 64
  %v617 = vpop.permute.xlu0 %616
  %v622 = vsel %vm307, %v469, %v507
  %v623 = vsel %vm307, %v468, %v509
  %v624 = vsel %vm307, %v467, %v511
  %v625 = vsel %vm307, %v466, %v513
  %v626 = vsel %vm312, %v622, %v523
  %v627 = vsel %vm312, %v623, %v525
  %v628 = vsel %vm312, %v624, %v527
  %v629 = vsel %vm312, %v625, %v529
  %v630 = vsel %vm317, %v626, %v539
  %v631 = vsel %vm317, %v627, %v541
  %v632 = vsel %vm317, %v628, %v543
  %v633 = vsel %vm317, %v629, %v545
  %v634 = vsel %vm322, %v630, %v555
  %v635 = vsel %vm322, %v631, %v557
  %v636 = vsel %vm322, %v632, %v559
  %v637 = vsel %vm322, %v633, %v561
  %v638 = vsel %vm327, %v634, %v571
  %v639 = vsel %vm327, %v635, %v573
  %v640 = vsel %vm327, %v636, %v575
  %v641 = vsel %vm327, %v637, %v577
  %v642 = vsel %vm332, %v638, %v587
  %v643 = vsel %vm332, %v639, %v589
  %v644 = vsel %vm332, %v640, %v591
  %v645 = vsel %vm332, %v641, %v593
  %v646 = vsel %vm337, %v642, %v599
  %v647 = vsel %vm337, %v643, %v601
  %v648 = vsel %vm337, %v644, %v603
  %v649 = vsel %vm337, %v645, %v605
  %v650 = vsel %vm342, %v646, %v611
  %v651 = vsel %vm342, %v647, %v613
  %v652 = vsel %vm342, %v648, %v615
  %v653 = vsel %vm342, %v649, %v617
  %v654 = vmul.f32 %v650, %v14
  %v655 = vmul.f32 %v651, %v15
  %v656 = vmul.f32 %v652, %v16
  %v657 = vmul.f32 %v653, %v17
  %v658 = vld [vmem:[%s2 + $0xb8] sm:$0xff]
  %v659 = vld [vmem:[%s2 + $0xc0] sm:$0xff]
  %v660 = vld [vmem:[%s2 + $0xc8] sm:$0xff]
  %v661 = vld [vmem:[%s2 + $0xd0] sm:$0xff]
  %v662 = vld [vmem:[%s2 + $0xd8] sm:$0xff]
  %v663 = vld [vmem:[%s2 + $0xe0] sm:$0xff]
  %v664 = vld [vmem:[%s2 + $0xe8] sm:$0xff]
  %v665 = vld [vmem:[%s2 + $0xf0] sm:$0xff]
  %v666 = vld [vmem:[%s2 + $0xf8] sm:$0xff]
  %v668 = vsel %vm360, %v654, 0
  %v671 = vsel %vm360, %v655, 0
  %v674 = vsel %vm360, %v656, 0
  %v677 = vsel %vm360, %v657, 0
  %679 = vmatprep.subr.mxu0 0.0
  %680 = vmatpush1.msra.mxu0 %v658
  %681 = vmatprep.subr.mxu0 0.0
  %682 = vmatpush1.msra.mxu0 %v659
  %683 = vmatprep.subr.mxu0 0.0
  %684 = vmatpush1.msra.mxu0 %v660
  %685 = vmatprep.subr.mxu0 0.0
  %686 = vmatpush1.msra.mxu0 %v661
  %687 = vmatprep.subr.mxu0 0.0
  %688 = vmatpush1.msra.mxu0 %v662
  %689 = vmatprep.subr.mxu0 0.0
  %690 = vmatpush1.msra.mxu0 %v663
  %691 = vmatprep.subr.mxu0 0.0
  %692 = vmatpush1.msra.mxu0 %v664
  %693 = vmatprep.subr.mxu0 0.0
  %694 = vmatpush1.msra.mxu0 %v665
  %695 = vmatprep.subr.mxu0 0.0
  %696 = vmatpush1.msra.mxu0 %v666
  %697 = vmatprep.subr.mxu0 0.0
  %698 = vmatpush1.msra.mxu0 0.0
  %699 = vmatprep.subr.mxu0 0.0
  %700 = vmatpush1.msra.mxu0 0.0
  %701 = vmatprep.subr.mxu0 0.0
  %702 = vmatpush1.msra.mxu0 0.0
  %703 = vmatprep.subr.mxu0 0.0
  %704 = vmatpush1.msra.mxu0 0.0
  %705 = vmatprep.subr.mxu0 0.0
  %706 = vmatpush1.msra.mxu0 0.0
  %707 = vmatprep.subr.mxu0 0.0
  %708 = vmatpush1.msra.mxu0 0.0
  %709 = vmatprep.subr.mxu0 0.0
  %710 = vmatpush1.msra.mxu0 0.0
  %711 = vmatprep.subr.mxu0 0.0
  %712 = vmatpush1.msra.mxu0 0.0
  %713 = vmatprep.subr.mxu0 0.0
  %714 = vmatpush1.msra.mxu0 0.0
  %715 = vmatprep.subr.mxu0 0.0
  %716 = vmatpush1.msra.mxu0 0.0
  %717 = vmatprep.subr.mxu0 0.0
  %718 = vmatpush1.msra.mxu0 0.0
  %719 = vmatprep.subr.mxu0 0.0
  %720 = vmatpush1.msra.mxu0 0.0
  %721 = vmatprep.subr.mxu0 0.0
  %722 = vmatpush1.msra.mxu0 0.0
  %723 = vmatprep.subr.mxu0 0.0
  %724 = vmatpush1.msra.mxu0 0.0
  %725 = vmatprep.subr.mxu0 0.0
  %726 = vmatpush1.msra.mxu0 0.0
  %727 = vmatprep.subr.mxu0 0.0
  %728 = vmatpush1.msra.mxu0 0.0
  %729 = vmatprep.subr.mxu0 0.0
  %730 = vmatpush1.msra.mxu0 0.0
  %731 = vmatprep.subr.mxu0 0.0
  %732 = vmatpush1.msra.mxu0 0.0
  %733 = vmatprep.subr.mxu0 0.0
  %734 = vmatpush1.msra.mxu0 0.0
  %735 = vmatprep.subr.mxu0 0.0
  %736 = vmatpush1.msra.mxu0 0.0
  %737 = vmatprep.subr.mxu0 0.0
  %738 = vmatpush1.msra.mxu0 0.0
  %739 = vmatprep.subr.mxu0 0.0
  %740 = vmatpush1.msra.mxu0 0.0
  %741 = vmatprep.subr.mxu0 0.0
  %742 = vmatpush1.msra.mxu0 0.0
  %743 = vmatprep.mubr.f32.mxu0 0.0
  %744 = vmatmul.mubr.f32.gmra.mrb[0].mxu0 %v668
  %v745 = vpop.f32.mrb[0].mxu0
  %v746 = vadd.f32 %v136, %v745
  %v747 = vpop.f32.mrb[0].mxu0
  %748 = vmatprep.mubr.f32.mxu0 0.0
  %749 = vmatmul.mubr.f32.gmra.mrb[0].mxu0 %v671
  %v750 = vpop.f32.mrb[0].mxu0
  %v751 = vadd.f32 %v137, %v750
  %v752 = vpop.f32.mrb[0].mxu0
  %753 = vmatprep.mubr.f32.mxu0 0.0
  %754 = vmatmul.mubr.f32.gmra.mrb[0].mxu0 %v674
  %v755 = vpop.f32.mrb[0].mxu0
  %v756 = vadd.f32 %v138, %v755
  %v757 = vpop.f32.mrb[0].mxu0
  %758 = vmatprep.mubr.f32.mxu0 0.0
  %759 = vmatmul.mubr.f32.gmra.mrb[0].mxu0 %v677
  %v760 = vpop.f32.mrb[0].mxu0
  %v761 = vadd.f32 %v139, %v760
  %v762 = vpop.f32.mrb[0].mxu0
  %763 = vdwg.mxu0
  %v764 = vmax.f32 %v746, 0.0
  %v765 = vmax.f32 %v751, 0.0
  %v766 = vmax.f32 %v756, 0.0
  %v767 = vmax.f32 %v761, 0.0
  %v768 = vrot.slane %v764, 3
  %v769 = vrot.slane %v765, 3
  %v770 = vrot.slane %v766, 3
  %v771 = vrot.slane %v767, 3
  %v772 = vsel %vm146, %v770, %v771
  %v773 = vsel %vm146, %v769, %v770
  %v774 = vsel %vm146, %v768, %v769
  %v775 = vsel %vm146, %v771, %v768
  %v776 = vrot.slane %v764, 4
  %v777 = vrot.slane %v765, 4
  %v778 = vrot.slane %v766, 4
  %v779 = vrot.slane %v767, 4
  %v780 = vsel %vm155, %v778, %v779
  %v781 = vsel %vm155, %v777, %v778
  %v782 = vsel %vm155, %v776, %v777
  %v783 = vsel %vm155, %v779, %v776
  %v784 = vrot.slane %v764, 5
  %v785 = vrot.slane %v765, 5
  %v786 = vrot.slane %v766, 5
  %v787 = vrot.slane %v767, 5
  %v788 = vsel %vm164, %v786, %v787
  %v789 = vsel %vm164, %v785, %v786
  %v790 = vsel %vm164, %v784, %v785
  %v791 = vsel %vm164, %v787, %v784
  %v792 = vrot.slane %v764, 7
  %v793 = vrot.slane %v765, 7
  %v794 = vrot.slane %v766, 7
  %v795 = vrot.slane %v767, 7
  %v796 = vsel %vm173, %v794, %v795
  %v797 = vsel %vm173, %v793, %v794
  %v798 = vsel %vm173, %v792, %v793
  %v799 = vsel %vm173, %v795, %v792
  %v800 = vrot.slane %v764, 1
  %v801 = vrot.slane %v765, 1
  %v802 = vrot.slane %v766, 1
  %v803 = vrot.slane %v767, 1
  %v804 = vsel %vm182, %v802, %v803
  %v805 = vsel %vm182, %v801, %v802
  %v806 = vsel %vm182, %v800, %v801
  %v807 = vsel %vm182, %v803, %v800
  %812 = vrot.lane.b32.xlu0 %v783, 8
  %v813 = vpop.permute.xlu0 %812
  %814 = vrot.lane.b32.xlu0 %v782, 8
  %v815 = vpop.permute.xlu0 %814
  %816 = vrot.lane.b32.xlu0 %v781, 8
  %v817 = vpop.permute.xlu0 %816
  %818 = vrot.lane.b32.xlu0 %v780, 8
  %v819 = vpop.permute.xlu0 %818
  %828 = vrot.lane.b32.xlu0 %v791, 16
  %v829 = vpop.permute.xlu0 %828
  %830 = vrot.lane.b32.xlu0 %v790, 16
  %v831 = vpop.permute.xlu0 %830
  %832 = vrot.lane.b32.xlu0 %v789, 16
  %v833 = vpop.permute.xlu0 %832
  %834 = vrot.lane.b32.xlu0 %v788, 16
  %v835 = vpop.permute.xlu0 %834
  %844 = vrot.lane.b32.xlu0 %v799, 24
  %v845 = vpop.permute.xlu0 %844
  %846 = vrot.lane.b32.xlu0 %v798, 24
  %v847 = vpop.permute.xlu0 %846
  %848 = vrot.lane.b32.xlu0 %v797, 24
  %v849 = vpop.permute.xlu0 %848
  %850 = vrot.lane.b32.xlu0 %v796, 24
  %v851 = vpop.permute.xlu0 %850
  %860 = vrot.lane.b32.xlu0 %v764, 32
  %v861 = vpop.permute.xlu0 %860
  %862 = vrot.lane.b32.xlu0 %v765, 32
  %v863 = vpop.permute.xlu0 %862
  %864 = vrot.lane.b32.xlu0 %v766, 32
  %v865 = vpop.permute.xlu0 %864
  %866 = vrot.lane.b32.xlu0 %v767, 32
  %v867 = vpop.permute.xlu0 %866
  %876 = vrot.lane.b32.xlu0 %v806, 40
  %v877 = vpop.permute.xlu0 %876
  %878 = vrot.lane.b32.xlu0 %v805, 40
  %v879 = vpop.permute.xlu0 %878
  %880 = vrot.lane.b32.xlu0 %v804, 40
  %v881 = vpop.permute.xlu0 %880
  %882 = vrot.lane.b32.xlu0 %v807, 40
  %v883 = vpop.permute.xlu0 %882
  %892 = vrot.lane.b32.xlu0 %v774, 48
  %v893 = vpop.permute.xlu0 %892
  %894 = vrot.lane.b32.xlu0 %v773, 48
  %v895 = vpop.permute.xlu0 %894
  %896 = vrot.lane.b32.xlu0 %v772, 48
  %v897 = vpop.permute.xlu0 %896
  %898 = vrot.lane.b32.xlu0 %v775, 48
  %v899 = vpop.permute.xlu0 %898
  %904 = vrot.lane.b32.xlu0 %v782, 56
  %v905 = vpop.permute.xlu0 %904
  %906 = vrot.lane.b32.xlu0 %v781, 56
  %v907 = vpop.permute.xlu0 %906
  %908 = vrot.lane.b32.xlu0 %v780, 56
  %v909 = vpop.permute.xlu0 %908
  %910 = vrot.lane.b32.xlu0 %v783, 56
  %v911 = vpop.permute.xlu0 %910
  %916 = vrot.lane.b32.xlu0 %v790, 64
  %v917 = vpop.permute.xlu0 %916
  %918 = vrot.lane.b32.xlu0 %v789, 64
  %v919 = vpop.permute.xlu0 %918
  %920 = vrot.lane.b32.xlu0 %v788, 64
  %v921 = vpop.permute.xlu0 %920
  %922 = vrot.lane.b32.xlu0 %v791, 64
  %v923 = vpop.permute.xlu0 %922
  %v928 = vsel %vm307, %v775, %v813
  %v929 = vsel %vm307, %v774, %v815
  %v930 = vsel %vm307, %v773, %v817
  %v931 = vsel %vm307, %v772, %v819
  %v932 = vsel %vm312, %v928, %v829
  %v933 = vsel %vm312, %v929, %v831
  %v934 = vsel %vm312, %v930, %v833
  %v935 = vsel %vm312, %v931, %v835
  %v936 = vsel %vm317, %v932, %v845
  %v937 = vsel %vm317, %v933, %v847
  %v938 = vsel %vm317, %v934, %v849
  %v939 = vsel %vm317, %v935, %v851
  %v940 = vsel %vm322, %v936, %v861
  %v941 = vsel %vm322, %v937, %v863
  %v942 = vsel %vm322, %v938, %v865
  %v943 = vsel %vm322, %v939, %v867
  %v944 = vsel %vm327, %v940, %v877
  %v945 = vsel %vm327, %v941, %v879
  %v946 = vsel %vm327, %v942, %v881
  %v947 = vsel %vm327, %v943, %v883
  %v948 = vsel %vm332, %v944, %v893
  %v949 = vsel %vm332, %v945, %v895
  %v950 = vsel %vm332, %v946, %v897
  %v951 = vsel %vm332, %v947, %v899
  %v952 = vsel %vm337, %v948, %v905
  %v953 = vsel %vm337, %v949, %v907
  %v954 = vsel %vm337, %v950, %v909
  %v955 = vsel %vm337, %v951, %v911
  %v956 = vsel %vm342, %v952, %v917
  %v957 = vsel %vm342, %v953, %v919
  %v958 = vsel %vm342, %v954, %v921
  %v959 = vsel %vm342, %v955, %v923
  %v960 = vmul.f32 %v956, %v14
  %v961 = vmul.f32 %v957, %v15
  %v962 = vmul.f32 %v958, %v16
  %v963 = vmul.f32 %v959, %v17
  %v964 = vld [vmem:[%s2 + $0x100] sm:$0xff]
  %v965 = vld [vmem:[%s2 + $0x108] sm:$0xff]
  %v966 = vld [vmem:[%s2 + $0x110] sm:$0xff]
  %v967 = vld [vmem:[%s2 + $0x118] sm:$0xff]
  %v968 = vld [vmem:[%s2 + $0x120] sm:$0xff]
  %v969 = vld [vmem:[%s2 + $0x128] sm:$0xff]
  %v970 = vld [vmem:[%s2 + $0x130] sm:$0xff]
  %v971 = vld [vmem:[%s2 + $0x138] sm:$0xff]
  %v972 = vld [vmem:[%s2 + $0x140] sm:$0xff]
  %v974 = vsel %vm360, %v960, 0
  %v977 = vsel %vm360, %v961, 0
  %v980 = vsel %vm360, %v962, 0
  %v983 = vsel %vm360, %v963, 0
  %985 = vmatprep.subr.mxu0 0.0
  %986 = vmatpush1.msra.mxu0 %v964
  %987 = vmatprep.subr.mxu0 0.0
  %988 = vmatpush1.msra.mxu0 %v965
  %989 = vmatprep.subr.mxu0 0.0
  %990 = vmatpush1.msra.mxu0 %v966
  %991 = vmatprep.subr.mxu0 0.0
  %992 = vmatpush1.msra.mxu0 %v967
  %993 = vmatprep.subr.mxu0 0.0
  %994 = vmatpush1.msra.mxu0 %v968
  %995 = vmatprep.subr.mxu0 0.0
  %996 = vmatpush1.msra.mxu0 %v969
  %997 = vmatprep.subr.mxu0 0.0
  %998 = vmatpush1.msra.mxu0 %v970
  %999 = vmatprep.subr.mxu0 0.0
  %1000 = vmatpush1.msra.mxu0 %v971
  %1001 = vmatprep.subr.mxu0 0.0
  %1002 = vmatpush1.msra.mxu0 %v972
  %1003 = vmatprep.subr.mxu0 0.0
  %1004 = vmatpush1.msra.mxu0 0.0
  %1005 = vmatprep.subr.mxu0 0.0
  %1006 = vmatpush1.msra.mxu0 0.0
  %1007 = vmatprep.subr.mxu0 0.0
  %1008 = vmatpush1.msra.mxu0 0.0
  %1009 = vmatprep.subr.mxu0 0.0
  %1010 = vmatpush1.msra.mxu0 0.0
  %1011 = vmatprep.subr.mxu0 0.0
  %1012 = vmatpush1.msra.mxu0 0.0
  %1013 = vmatprep.subr.mxu0 0.0
  %1014 = vmatpush1.msra.mxu0 0.0
  %1015 = vmatprep.subr.mxu0 0.0
  %1016 = vmatpush1.msra.mxu0 0.0
  %1017 = vmatprep.subr.mxu0 0.0
  %1018 = vmatpush1.msra.mxu0 0.0
  %1019 = vmatprep.subr.mxu0 0.0
  %1020 = vmatpush1.msra.mxu0 0.0
  %1021 = vmatprep.subr.mxu0 0.0
  %1022 = vmatpush1.msra.mxu0 0.0
  %1023 = vmatprep.subr.mxu0 0.0
  %1024 = vmatpush1.msra.mxu0 0.0
  %1025 = vmatprep.subr.mxu0 0.0
  %1026 = vmatpush1.msra.mxu0 0.0
  %1027 = vmatprep.subr.mxu0 0.0
  %1028 = vmatpush1.msra.mxu0 0.0
  %1029 = vmatprep.subr.mxu0 0.0
  %1030 = vmatpush1.msra.mxu0 0.0
  %1031 = vmatprep.subr.mxu0 0.0
  %1032 = vmatpush1.msra.mxu0 0.0
  %1033 = vmatprep.subr.mxu0 0.0
  %1034 = vmatpush1.msra.mxu0 0.0
  %1035 = vmatprep.subr.mxu0 0.0
  %1036 = vmatpush1.msra.mxu0 0.0
  %1037 = vmatprep.subr.mxu0 0.0
  %1038 = vmatpush1.msra.mxu0 0.0
  %1039 = vmatprep.subr.mxu0 0.0
  %1040 = vmatpush1.msra.mxu0 0.0
  %1041 = vmatprep.subr.mxu0 0.0
  %1042 = vmatpush1.msra.mxu0 0.0
  %1043 = vmatprep.subr.mxu0 0.0
  %1044 = vmatpush1.msra.mxu0 0.0
  %1045 = vmatprep.subr.mxu0 0.0
  %1046 = vmatpush1.msra.mxu0 0.0
  %1047 = vmatprep.subr.mxu0 0.0
  %1048 = vmatpush1.msra.mxu0 0.0
  %1049 = vmatprep.mubr.f32.mxu0 0.0
  %1050 = vmatmul.mubr.f32.gmra.mrb[0].mxu0 %v974
  %v1051 = vpop.f32.mrb[0].mxu0
  %v1052 = vadd.f32 0.0, %v1051
  %v1053 = vpop.f32.mrb[0].mxu0
  %1054 = vmatprep.mubr.f32.mxu0 0.0
  %1055 = vmatmul.mubr.f32.gmra.mrb[0].mxu0 %v977
  %v1056 = vpop.f32.mrb[0].mxu0
  %v1057 = vadd.f32 0.0, %v1056
  %v1058 = vpop.f32.mrb[0].mxu0
  %1059 = vmatprep.mubr.f32.mxu0 0.0
  %1060 = vmatmul.mubr.f32.gmra.mrb[0].mxu0 %v980
  %v1061 = vpop.f32.mrb[0].mxu0
  %v1062 = vadd.f32 0.0, %v1061
  %v1063 = vpop.f32.mrb[0].mxu0
  %1064 = vmatprep.mubr.f32.mxu0 0.0
  %1065 = vmatmul.mubr.f32.gmra.mrb[0].mxu0 %v983
  %v1066 = vpop.f32.mrb[0].mxu0
  %v1067 = vadd.f32 0.0, %v1066
  %v1068 = vpop.f32.mrb[0].mxu0
  %1069 = vdwg.mxu0
  %v1070 = vmax.f32 %v1052, 0.0
  %v1071 = vmax.f32 %v1057, 0.0
  %v1072 = vmax.f32 %v1062, 0.0
  %v1073 = vmax.f32 %v1067, 0.0
  %v1074 = vrot.slane %v1070, 3
  %v1075 = vrot.slane %v1071, 3
  %v1076 = vrot.slane %v1072, 3
  %v1077 = vrot.slane %v1073, 3
  %v1078 = vsel %vm146, %v1076, %v1077
  %v1079 = vsel %vm146, %v1075, %v1076
  %v1080 = vsel %vm146, %v1074, %v1075
  %v1081 = vsel %vm146, %v1077, %v1074
  %v1082 = vrot.slane %v1070, 4
  %v1083 = vrot.slane %v1071, 4
  %v1084 = vrot.slane %v1072, 4
  %v1085 = vrot.slane %v1073, 4
  %v1086 = vsel %vm155, %v1084, %v1085
  %v1087 = vsel %vm155, %v1083, %v1084
  %v1088 = vsel %vm155, %v1082, %v1083
  %v1089 = vsel %vm155, %v1085, %v1082
  %v1090 = vrot.slane %v1070, 5
  %v1091 = vrot.slane %v1071, 5
  %v1092 = vrot.slane %v1072, 5
  %v1093 = vrot.slane %v1073, 5
  %v1094 = vsel %vm164, %v1092, %v1093
  %v1095 = vsel %vm164, %v1091, %v1092
  %v1096 = vsel %vm164, %v1090, %v1091
  %v1097 = vsel %vm164, %v1093, %v1090
  %v1098 = vrot.slane %v1070, 7
  %v1099 = vrot.slane %v1071, 7
  %v1100 = vrot.slane %v1072, 7
  %v1101 = vrot.slane %v1073, 7
  %v1102 = vsel %vm173, %v1100, %v1101
  %v1103 = vsel %vm173, %v1099, %v1100
  %v1104 = vsel %vm173, %v1098, %v1099
  %v1105 = vsel %vm173, %v1101, %v1098
  %v1106 = vrot.slane %v1070, 1
  %v1107 = vrot.slane %v1071, 1
  %v1108 = vrot.slane %v1072, 1
  %v1109 = vrot.slane %v1073, 1
  %v1110 = vsel %vm182, %v1108, %v1109
  %v1111 = vsel %vm182, %v1107, %v1108
  %v1112 = vsel %vm182, %v1106, %v1107
  %v1113 = vsel %vm182, %v1109, %v1106
  %1118 = vrot.lane.b32.xlu0 %v1089, 8
  %v1119 = vpop.permute.xlu0 %1118
  %1120 = vrot.lane.b32.xlu0 %v1088, 8
  %v1121 = vpop.permute.xlu0 %1120
  %1122 = vrot.lane.b32.xlu0 %v1087, 8
  %v1123 = vpop.permute.xlu0 %1122
  %1124 = vrot.lane.b32.xlu0 %v1086, 8
  %v1125 = vpop.permute.xlu0 %1124
  %1134 = vrot.lane.b32.xlu0 %v1097, 16
  %v1135 = vpop.permute.xlu0 %1134
  %1136 = vrot.lane.b32.xlu0 %v1096, 16
  %v1137 = vpop.permute.xlu0 %1136
  %1138 = vrot.lane.b32.xlu0 %v1095, 16
  %v1139 = vpop.permute.xlu0 %1138
  %1140 = vrot.lane.b32.xlu0 %v1094, 16
  %v1141 = vpop.permute.xlu0 %1140
  %1150 = vrot.lane.b32.xlu0 %v1105, 24
  %v1151 = vpop.permute.xlu0 %1150
  %1152 = vrot.lane.b32.xlu0 %v1104, 24
  %v1153 = vpop.permute.xlu0 %1152
  %1154 = vrot.lane.b32.xlu0 %v1103, 24
  %v1155 = vpop.permute.xlu0 %1154
  %1156 = vrot.lane.b32.xlu0 %v1102, 24
  %v1157 = vpop.permute.xlu0 %1156
  %1166 = vrot.lane.b32.xlu0 %v1070, 32
  %v1167 = vpop.permute.xlu0 %1166
  %1168 = vrot.lane.b32.xlu0 %v1071, 32
  %v1169 = vpop.permute.xlu0 %1168
  %1170 = vrot.lane.b32.xlu0 %v1072, 32
  %v1171 = vpop.permute.xlu0 %1170
  %1172 = vrot.lane.b32.xlu0 %v1073, 32
  %v1173 = vpop.permute.xlu0 %1172
  %1182 = vrot.lane.b32.xlu0 %v1112, 40
  %v1183 = vpop.permute.xlu0 %1182
  %1184 = vrot.lane.b32.xlu0 %v1111, 40
  %v1185 = vpop.permute.xlu0 %1184
  %1186 = vrot.lane.b32.xlu0 %v1110, 40
  %v1187 = vpop.permute.xlu0 %1186
  %1188 = vrot.lane.b32.xlu0 %v1113, 40
  %v1189 = vpop.permute.xlu0 %1188
  %1198 = vrot.lane.b32.xlu0 %v1080, 48
  %v1199 = vpop.permute.xlu0 %1198
  %1200 = vrot.lane.b32.xlu0 %v1079, 48
  %v1201 = vpop.permute.xlu0 %1200
  %1202 = vrot.lane.b32.xlu0 %v1078, 48
  %v1203 = vpop.permute.xlu0 %1202
  %1204 = vrot.lane.b32.xlu0 %v1081, 48
  %v1205 = vpop.permute.xlu0 %1204
  %1210 = vrot.lane.b32.xlu0 %v1088, 56
  %v1211 = vpop.permute.xlu0 %1210
  %1212 = vrot.lane.b32.xlu0 %v1087, 56
  %v1213 = vpop.permute.xlu0 %1212
  %1214 = vrot.lane.b32.xlu0 %v1086, 56
  %v1215 = vpop.permute.xlu0 %1214
  %1216 = vrot.lane.b32.xlu0 %v1089, 56
  %v1217 = vpop.permute.xlu0 %1216
  %1222 = vrot.lane.b32.xlu0 %v1096, 64
  %v1223 = vpop.permute.xlu0 %1222
  %1224 = vrot.lane.b32.xlu0 %v1095, 64
  %v1225 = vpop.permute.xlu0 %1224
  %1226 = vrot.lane.b32.xlu0 %v1094, 64
  %v1227 = vpop.permute.xlu0 %1226
  %1228 = vrot.lane.b32.xlu0 %v1097, 64
  %v1229 = vpop.permute.xlu0 %1228
  %v1234 = vsel %vm307, %v1081, %v1119
  %v1235 = vsel %vm307, %v1080, %v1121
  %v1236 = vsel %vm307, %v1079, %v1123
  %v1237 = vsel %vm307, %v1078, %v1125
  %v1238 = vsel %vm312, %v1234, %v1135
  %v1239 = vsel %vm312, %v1235, %v1137
  %v1240 = vsel %vm312, %v1236, %v1139
  %v1241 = vsel %vm312, %v1237, %v1141
  %v1242 = vsel %vm317, %v1238, %v1151
  %v1243 = vsel %vm317, %v1239, %v1153
  %v1244 = vsel %vm317, %v1240, %v1155
  %v1245 = vsel %vm317, %v1241, %v1157
  %v1246 = vsel %vm322, %v1242, %v1167
  %v1247 = vsel %vm322, %v1243, %v1169
  %v1248 = vsel %vm322, %v1244, %v1171
  %v1249 = vsel %vm322, %v1245, %v1173
  %v1250 = vsel %vm327, %v1246, %v1183
  %v1251 = vsel %vm327, %v1247, %v1185
  %v1252 = vsel %vm327, %v1248, %v1187
  %v1253 = vsel %vm327, %v1249, %v1189
  %v1254 = vsel %vm332, %v1250, %v1199
  %v1255 = vsel %vm332, %v1251, %v1201
  %v1256 = vsel %vm332, %v1252, %v1203
  %v1257 = vsel %vm332, %v1253, %v1205
  %v1258 = vsel %vm337, %v1254, %v1211
  %v1259 = vsel %vm337, %v1255, %v1213
  %v1260 = vsel %vm337, %v1256, %v1215
  %v1261 = vsel %vm337, %v1257, %v1217
  %v1262 = vsel %vm342, %v1258, %v1223
  %v1263 = vsel %vm342, %v1259, %v1225
  %v1264 = vsel %vm342, %v1260, %v1227
  %v1265 = vsel %vm342, %v1261, %v1229
  %v1266 = vmul.f32 %v1262, %v14
  %v1267 = vmul.f32 %v1263, %v15
  %v1268 = vmul.f32 %v1264, %v16
  %v1269 = vmul.f32 %v1265, %v17
  %v1270 = vld [vmem:[%s2 + $0x148] sm:$0xff]
  %v1271 = vld [vmem:[%s2 + $0x150] sm:$0xff]
  %v1272 = vld [vmem:[%s2 + $0x158] sm:$0xff]
  %v1273 = vld [vmem:[%s2 + $0x160] sm:$0xff]
  %v1274 = vld [vmem:[%s2 + $0x168] sm:$0xff]
  %v1275 = vld [vmem:[%s2 + $0x170] sm:$0xff]
  %v1276 = vld [vmem:[%s2 + $0x178] sm:$0xff]
  %v1277 = vld [vmem:[%s2 + $0x180] sm:$0xff]
  %v1278 = vld [vmem:[%s2 + $0x188] sm:$0xff]
  %v1280 = vsel %vm360, %v1266, 0
  %v1283 = vsel %vm360, %v1267, 0
  %v1286 = vsel %vm360, %v1268, 0
  %v1289 = vsel %vm360, %v1269, 0
  %1291 = vmatprep.subr.mxu0 0.0
  %1292 = vmatpush1.msra.mxu0 %v1270
  %1293 = vmatprep.subr.mxu0 0.0
  %1294 = vmatpush1.msra.mxu0 %v1271
  %1295 = vmatprep.subr.mxu0 0.0
  %1296 = vmatpush1.msra.mxu0 %v1272
  %1297 = vmatprep.subr.mxu0 0.0
  %1298 = vmatpush1.msra.mxu0 %v1273
  %1299 = vmatprep.subr.mxu0 0.0
  %1300 = vmatpush1.msra.mxu0 %v1274
  %1301 = vmatprep.subr.mxu0 0.0
  %1302 = vmatpush1.msra.mxu0 %v1275
  %1303 = vmatprep.subr.mxu0 0.0
  %1304 = vmatpush1.msra.mxu0 %v1276
  %1305 = vmatprep.subr.mxu0 0.0
  %1306 = vmatpush1.msra.mxu0 %v1277
  %1307 = vmatprep.subr.mxu0 0.0
  %1308 = vmatpush1.msra.mxu0 %v1278
  %1309 = vmatprep.subr.mxu0 0.0
  %1310 = vmatpush1.msra.mxu0 0.0
  %1311 = vmatprep.subr.mxu0 0.0
  %1312 = vmatpush1.msra.mxu0 0.0
  %1313 = vmatprep.subr.mxu0 0.0
  %1314 = vmatpush1.msra.mxu0 0.0
  %1315 = vmatprep.subr.mxu0 0.0
  %1316 = vmatpush1.msra.mxu0 0.0
  %1317 = vmatprep.subr.mxu0 0.0
  %1318 = vmatpush1.msra.mxu0 0.0
  %1319 = vmatprep.subr.mxu0 0.0
  %1320 = vmatpush1.msra.mxu0 0.0
  %1321 = vmatprep.subr.mxu0 0.0
  %1322 = vmatpush1.msra.mxu0 0.0
  %1323 = vmatprep.subr.mxu0 0.0
  %1324 = vmatpush1.msra.mxu0 0.0
  %1325 = vmatprep.subr.mxu0 0.0
  %1326 = vmatpush1.msra.mxu0 0.0
  %1327 = vmatprep.subr.mxu0 0.0
  %1328 = vmatpush1.msra.mxu0 0.0
  %1329 = vmatprep.subr.mxu0 0.0
  %1330 = vmatpush1.msra.mxu0 0.0
  %1331 = vmatprep.subr.mxu0 0.0
  %1332 = vmatpush1.msra.mxu0 0.0
  %1333 = vmatprep.subr.mxu0 0.0
  %1334 = vmatpush1.msra.mxu0 0.0
  %1335 = vmatprep.subr.mxu0 0.0
  %1336 = vmatpush1.msra.mxu0 0.0
  %1337 = vmatprep.subr.mxu0 0.0
  %1338 = vmatpush1.msra.mxu0 0.0
  %1339 = vmatprep.subr.mxu0 0.0
  %1340 = vmatpush1.msra.mxu0 0.0
  %1341 = vmatprep.subr.mxu0 0.0
  %1342 = vmatpush1.msra.mxu0 0.0
  %1343 = vmatprep.subr.mxu0 0.0
  %1344 = vmatpush1.msra.mxu0 0.0
  %1345 = vmatprep.subr.mxu0 0.0
  %1346 = vmatpush1.msra.mxu0 0.0
  %1347 = vmatprep.subr.mxu0 0.0
  %1348 = vmatpush1.msra.mxu0 0.0
  %1349 = vmatprep.subr.mxu0 0.0
  %1350 = vmatpush1.msra.mxu0 0.0
  %1351 = vmatprep.subr.mxu0 0.0
  %1352 = vmatpush1.msra.mxu0 0.0
  %1353 = vmatprep.subr.mxu0 0.0
  %1354 = vmatpush1.msra.mxu0 0.0
  %1355 = vmatprep.mubr.f32.mxu0 0.0
  %1356 = vmatmul.mubr.f32.gmra.mrb[0].mxu0 %v1280
  %v1357 = vpop.f32.mrb[0].mxu0
  %v1358 = vadd.f32 %v764, %v1357
  %v1359 = vpop.f32.mrb[0].mxu0
  %1360 = vmatprep.mubr.f32.mxu0 0.0
  %1361 = vmatmul.mubr.f32.gmra.mrb[0].mxu0 %v1283
  %v1362 = vpop.f32.mrb[0].mxu0
  %v1363 = vadd.f32 %v765, %v1362
  %v1364 = vpop.f32.mrb[0].mxu0
  %1365 = vmatprep.mubr.f32.mxu0 0.0
  %1366 = vmatmul.mubr.f32.gmra.mrb[0].mxu0 %v1286
  %v1367 = vpop.f32.mrb[0].mxu0
  %v1368 = vadd.f32 %v766, %v1367
  %v1369 = vpop.f32.mrb[0].mxu0
  %1370 = vmatprep.mubr.f32.mxu0 0.0
  %1371 = vmatmul.mubr.f32.gmra.mrb[0].mxu0 %v1289
  %v1372 = vpop.f32.mrb[0].mxu0
  %v1373 = vadd.f32 %v767, %v1372
  %v1374 = vpop.f32.mrb[0].mxu0
  %1375 = vdwg.mxu0
  %v1376 = vmax.f32 %v1358, 0.0
  %v1377 = vmax.f32 %v1363, 0.0
  %v1378 = vmax.f32 %v1368, 0.0
  %v1379 = vmax.f32 %v1373, 0.0
  %v1380 = vlaneseq
  %v1381 = vshrl.u32 %v1380, 7
  %v1382 = vsub.s32 0, %v1381
  %v1383 = vrot.slane %v29, %v1382
  %v1385 = vsel %vm307, %v1376, 0
  %v1388 = vsel %vm307, %v1377, 0
  %v1391 = vsel %vm307, %v1378, 0
  %v1394 = vsel %vm307, %v1379, 0
  %1396 = vmatprep.subr.mxu0 0.0
  %1397 = vmatpush1.msra.mxu0 %v28
  %1398 = vmatprep.subr.mxu0 0.0
  %1399 = vmatpush1.msra.mxu0 0.0
  %1400 = vmatprep.subr.mxu0 0.0
  %1401 = vmatpush1.msra.mxu0 0.0
  %1402 = vmatprep.subr.mxu0 0.0
  %1403 = vmatpush1.msra.mxu0 0.0
  %1404 = vmatprep.subr.mxu0 0.0
  %1405 = vmatpush1.msra.mxu0 0.0
  %1406 = vmatprep.subr.mxu0 0.0
  %1407 = vmatpush1.msra.mxu0 0.0
  %1408 = vmatprep.subr.mxu0 0.0
  %1409 = vmatpush1.msra.mxu0 0.0
  %1410 = vmatprep.subr.mxu0 0.0
  %1411 = vmatpush1.msra.mxu0 0.0
  %1412 = vmatprep.subr.mxu0 0.0
  %1413 = vmatpush1.msra.mxu0 0.0
  %1414 = vmatprep.subr.mxu0 0.0
  %1415 = vmatpush1.msra.mxu0 0.0
  %1416 = vmatprep.subr.mxu0 0.0
  %1417 = vmatpush1.msra.mxu0 0.0
  %1418 = vmatprep.subr.mxu0 0.0
  %1419 = vmatpush1.msra.mxu0 0.0
  %1420 = vmatprep.subr.mxu0 0.0
  %1421 = vmatpush1.msra.mxu0 0.0
  %1422 = vmatprep.subr.mxu0 0.0
  %1423 = vmatpush1.msra.mxu0 0.0
  %1424 = vmatprep.subr.mxu0 0.0
  %1425 = vmatpush1.msra.mxu0 0.0
  %1426 = vmatprep.subr.mxu0 0.0
  %1427 = vmatpush1.msra.mxu0 0.0
  %1428 = vmatprep.subr.mxu0 0.0
  %1429 = vmatpush1.msra.mxu0 0.0
  %1430 = vmatprep.subr.mxu0 0.0
  %1431 = vmatpush1.msra.mxu0 0.0
  %1432 = vmatprep.subr.mxu0 0.0
  %1433 = vmatpush1.msra.mxu0 0.0
  %1434 = vmatprep.subr.mxu0 0.0
  %1435 = vmatpush1.msra.mxu0 0.0
  %1436 = vmatprep.subr.mxu0 0.0
  %1437 = vmatpush1.msra.mxu0 0.0
  %1438 = vmatprep.subr.mxu0 0.0
  %1439 = vmatpush1.msra.mxu0 0.0
  %1440 = vmatprep.subr.mxu0 0.0
  %1441 = vmatpush1.msra.mxu0 0.0
  %1442 = vmatprep.subr.mxu0 0.0
  %1443 = vmatpush1.msra.mxu0 0.0
  %1444 = vmatprep.subr.mxu0 0.0
  %1445 = vmatpush1.msra.mxu0 0.0
  %1446 = vmatprep.subr.mxu0 0.0
  %1447 = vmatpush1.msra.mxu0 0.0
  %1448 = vmatprep.subr.mxu0 0.0
  %1449 = vmatpush1.msra.mxu0 0.0
  %1450 = vmatprep.subr.mxu0 0.0
  %1451 = vmatpush1.msra.mxu0 0.0
  %1452 = vmatprep.subr.mxu0 0.0
  %1453 = vmatpush1.msra.mxu0 0.0
  %1454 = vmatprep.subr.mxu0 0.0
  %1455 = vmatpush1.msra.mxu0 0.0
  %1456 = vmatprep.subr.mxu0 0.0
  %1457 = vmatpush1.msra.mxu0 0.0
  %1458 = vmatprep.subr.mxu0 0.0
  %1459 = vmatpush1.msra.mxu0 0.0
  %1460 = vmatprep.mubr.f32.mxu0 0.0
  %1461 = vmatmul.mubr.f32.gmra.mrb[0].mxu0 %v1385
  %v1462 = vpop.f32.mrb[0].mxu0
  %v1463 = vadd.f32 %v1383, %v1462
  %v1464 = vpop.f32.mrb[0].mxu0
  %1465 = vmatprep.mubr.f32.mxu0 0.0
  %1466 = vmatmul.mubr.f32.gmra.mrb[0].mxu0 %v1388
  %v1467 = vpop.f32.mrb[0].mxu0
  %v1468 = vadd.f32 %v1383, %v1467
  %v1469 = vpop.f32.mrb[0].mxu0
  %1470 = vmatprep.mubr.f32.mxu0 0.0
  %1471 = vmatmul.mubr.f32.gmra.mrb[0].mxu0 %v1391
  %v1472 = vpop.f32.mrb[0].mxu0
  %v1473 = vadd.f32 %v1383, %v1472
  %v1474 = vpop.f32.mrb[0].mxu0
  %1475 = vmatprep.mubr.f32.mxu0 0.0
  %1476 = vmatmul.mubr.f32.gmra.mrb[0].mxu0 %v1394
  %v1477 = vpop.f32.mrb[0].mxu0
  %v1478 = vadd.f32 %v1383, %v1477
  %v1479 = vpop.f32.mrb[0].mxu0
  %1480 = vdwg.mxu0
  %v1481 = vmul.f32 %v1463, %v1463
  %v1482 = vmul.f32 %v1468, %v1468
  %v1483 = vmul.f32 %v1473, %v1473
  %v1484 = vmul.f32 %v1478, %v1478
  %v1485 = vadd.f32 %v1481, %v1482
  %v1486 = vadd.f32 %v1485, %v1483
  %v1487 = vadd.f32 %v1486, %v1484
  %1488 = vadd.xlane.f32.xlu0 %v1487
  %v1489 = vpop.xlane.xlu0 %1488
  %v1490 = vrot.slane %v1489, 4
  %v1491 = vadd.f32 %v1489, %v1490
  %v1492 = vrot.slane %v1491, 2
  %v1493 = vadd.f32 %v1491, %v1492
  %v1494 = vrot.slane %v1493, 1
  %v1495 = vadd.f32 %v1493, %v1494
  %s1496 = vtos %v1495
  %v1497 = vstv %s1496
  %v1498 = vld [vmem:[%s1] sm:$0x3f]
  %v1499 = vld [vmem:[%s1 + $0x8] sm:$0x3f]
  %v1500 = vmul.f32 %v1498, %v1498
  %v1501 = vmul.f32 %v1499, %v1499
  %vm1502 = vcmask 1045504
  %v1503 = vsel %vm1502, %v1500, 0.0
  %v1504 = vsel %vm1502, %v1501, 0.0
  %v1505 = vadd.f32 %v1503, %v1504
  %1506 = vadd.xlane.f32.xlu0 %v1505
  %v1507 = vpop.xlane.xlu0 %1506
  %v1508 = vrot.slane %v1507, 4
  %v1509 = vadd.f32 %v1507, %v1508
  %v1510 = vrot.slane %v1509, 2
  %v1511 = vadd.f32 %v1509, %v1510
  %v1512 = vrot.slane %v1511, 1
  %v1513 = vadd.f32 %v1511, %v1512
  %s1514 = vtos %v1513
  %v1515 = vstv %s1514
  %v1516 = vrcp.pop %v1497
  %v1517 = vmul.f32 %v1515, %v1516
  %v1518 = vrsqrt.pop %v1517
  %v1519 = vmul.f32 %v1517, %v1518
  %vm1520 = vcmp.eq.f32.partialorder %v1517, inf
  %v1521 = vsel %vm1520, %v1517, %v1519
  %vm1522 = vcmp.eq.f32.partialorder %v1517, 0.0
  %v1523 = vand.u32 %v1517, 2147483648
  %v1524 = vsel %vm1522, %v1523, %v1521
  %v1525 = vadd.s32 %v145, 8
  %v1526 = vadd.s32 %v145, 16
  %v1527 = vadd.s32 %v145, 24
  %v1528 = vlaneseq
  %v1529 = vand.u32 %v1528, 127
  %vm1530 = vcmp.eq.s32.totalorder %v145, 0
  %vm1531 = vcmp.eq.s32.totalorder %v1525, 0
  %vm1532 = vcmp.eq.s32.totalorder %v1526, 0
  %vm1533 = vcmp.eq.s32.totalorder %v1527, 0
  %vm1534 = vcmp.eq.s32.totalorder %v1529, 3
  %vm1535 = vmand %vm1530, %vm1534
  %vm1536 = vmand %vm1531, %vm1534
  %vm1537 = vmand %vm1532, %vm1534
  %vm1538 = vmand %vm1533, %vm1534
  %v1539 = vtanh.pop %v1463
  %v1540 = vtanh.pop %v1468
  %v1541 = vtanh.pop %v1473
  %v1542 = vtanh.pop %v1478
  %v1543 = vsel %vm1535, %v1524, %v1539
  %v1544 = vsel %vm1536, %v1524, %v1540
  %v1545 = vsel %vm1537, %v1524, %v1541
  %v1546 = vsel %vm1538, %v1524, %v1542
  %1547 = vst [vmem:[%s3] sm:$0xff] %v1543
  %1548 = vst [vmem:[%s3 + $0x8] sm:$0xff] %v1544
  %1549 = vst [vmem:[%s3 + $0x10] sm:$0xff] %v1545
  %1550 = vst [vmem:[%s3 + $0x18] sm:$0xff] %v1546
  // Predicated region
  $region14: #{tiny_deco_forward.1} parent=0 // pred_check
    _
  $region15: #{tiny_deco_forward.1} parent=0 // pred_check_branch
    %1552 = sbr.rel (0) target = $region17
  $region16: #{tiny_deco_forward.1} parent=0 // pred_region
    _
  $region17: #{tiny_deco_forward.1} parent=0 // pred_fallthru
    _
  // Predicated region
  $region18: #{tiny_deco_forward.1} parent=0 // pred_check
    _
  $region19: #{tiny_deco_forward.1} parent=0 // pred_check_branch
    %1554 = sbr.rel (0) target = $region21
  $region20: #{tiny_deco_forward.1} parent=0 // pred_region
    _
  $region21: #{tiny_deco_forward.1} parent=0 // pred_fallthru
    _

</llo_original>
